<compile_context>
chip_gen: v5e
topology: v5e:2x2
jax: 0.10.0
libtpu: 0.0.40
codegen_flags: <defaults>
</compile_context>

<pallas_src>
import functools

import jax
import jax.numpy as jnp
from jax.experimental import pallas as pl
from jax.experimental.pallas import tpu as pltpu

LN_EPS = 1e-5


def _round_up(v, m):
    return (v + m - 1) // m * m


def _merge_kernel(c_out, w_out, y_ref, halo_ref, w_ref, vec_ref, o_ref, sh_ref):
    # y_ref:    (1, tr, Wc, 4C) bf16   main row-slab of space-to-depth input
    # halo_ref: (1, 1,  Wc, 4C) bf16   next coarse row (bottom halo)
    # w_ref:    (4, 4C, N)      bf16   2x2 tap weights (zero-padded taps/cols)
    # vec_ref:  (3, N)          f32    rows: conv bias / ln gamma / ln beta
    # o_ref:    (1, tr*W', N)   out    flat, lane-dense output rows
    # sh_ref:   ((tr+1)*Wc, 4C) bf16   scratch: slab shifted by one coarse col
    _, tr, wc, k4 = y_ref.shape
    n = o_ref.shape[-1]
    m = tr * wc

    x_main = y_ref[0].reshape(m, k4)          # free reshape: wc % 8 == 0
    x_halo = halo_ref[0, 0]                   # (wc, k4)

    # Single shifted copy: sh[i] = slab[i + 1], slab = concat(x_main, x_halo).
    # The two rows left unwritten (m-1 and m+wc-1) only ever feed coarse
    # columns >= w_out, which are discarded before the epilogue.
    sh_ref[pl.ds(0, m - 1), :] = x_main[1:, :]
    sh_ref[pl.ds(m, wc - 1), :] = x_halo[1:, :]

    def mm(a, w):
        return jax.lax.dot_general(
            a, w, (((1,), (0,)), ((), ())), preferred_element_type=jnp.float32)

    # 2x2 / stride-1 conv over the coarse grid == original 3x3 / stride-2 conv.
    acc = mm(x_main, w_ref[0])                           # tap (0,0) inits acc
    acc = acc + mm(sh_ref[pl.ds(0, m), :], w_ref[1])     # tap (0,1)

    inv_c = 1.0 / c_out
    pad_ch = float(n - c_out)

    def finish(block, rows, out_off):
        # block: (rows*wc, n) f32.  Drop coarse columns >= w_out, then fuse
        # conv bias + LayerNorm (two-pass variance; padded channels are exact
        # zeros before centering -> subtract their contribution back out).
        a3 = block.reshape(rows, wc, n)                  # free: wc % 8 == 0
        av = a3[:, :w_out, :].reshape(rows * w_out, n)   # compaction (VMEM-local)
        yb = av + vec_ref[0:1, :]
        mean = jnp.sum(yb, axis=-1, keepdims=True) * inv_c
        cen = yb - mean
        ssq = jnp.sum(cen * cen, axis=-1, keepdims=True) - pad_ch * mean * mean
        rstd = jax.lax.rsqrt(ssq * inv_c + LN_EPS)
        res = cen * (rstd * vec_ref[1:2, :]) + vec_ref[2:3, :]
        o_ref[0, pl.ds(out_off, rows * w_out), :] = res.astype(o_ref.dtype)

    # dh=1 taps read the next coarse row: main rows come from x_main / sh at a
    # wc-aligned offset; the last output row uses the halo.  No slab copy.
    if tr > 1:
        top_rows = (tr - 1) * wc
        top = (mm(x_main[wc:, :], w_ref[2])
               + mm(sh_ref[pl.ds(wc, top_rows), :], w_ref[3]))
        finish(acc[:top_rows] + top, tr - 1, 0)
        bot = mm(x_halo, w_ref[2]) + mm(sh_ref[pl.ds(m, wc), :], w_ref[3])
        finish(acc[top_rows:] + bot, 1, (tr - 1) * w_out)
    else:
        bot = mm(x_halo, w_ref[2]) + mm(sh_ref[pl.ds(m, wc), :], w_ref[3])
        finish(acc + bot, 1, 0)


def merge_block_forward(x, spatial_shape, params, *, vmem_budget_bytes=36 << 20):
    """x: (B, H*W, C) ; returns (B, H'*W', C_out)."""
    H, W = spatial_shape
    B, HW, C = x.shape
    assert HW == H * W, f"spatial shape mismatch, L={HW}, H={H}, W={W}"

    conv_w, conv_b = params["conv_w"], params["conv_b"]
    ln_g, ln_b = params["ln_g"], params["ln_b"]
    C_out = conv_w.shape[0]

    H_out = (H + 1) // 2
    W_out = (W + 1) // 2
    K4 = 4 * C
    N_pad = _round_up(max(C_out, 128), 128)      # lane-dense output width
    Wc = _round_up(W_out + 1, 8)                 # coarse width incl. right halo
    out_isize = jnp.dtype(x.dtype).itemsize

    # ---- input: pad + space-to-depth -> (B, H'+1, Wc, 4C), cast bf16 ----
    # TODO(synk): for v5e, the space-to-depth pre-pass could be fused into the
    # kernel with strided reads if it ever dominates end-to-end time.
    x_nhwc = x.reshape(B, H, W, C)
    Hp, Wp = 2 * (H_out + 1), 2 * Wc
    x_pad = jnp.pad(x_nhwc, ((0, 0), (1, Hp - H - 1), (1, Wp - W - 1), (0, 0)))
    y = x_pad.reshape(B, H_out + 1, 2, Wc, 2, C)
    y = jnp.transpose(y, (0, 1, 3, 2, 4, 5)).reshape(B, H_out + 1, Wc, K4)
    y = y.astype(jnp.bfloat16)

    # ---- weight: (C_out, C, 3, 3) -> (4 taps, 4C, N_pad), bf16 ----
    # tap index = 2*dh + dw, contraction index = (ph*2 + pw)*C + c,
    # original tap (kh, kw) = (2*dh + ph, 2*dw + pw); kh==3 / kw==3 are zero.
    w_hwio = jnp.transpose(conv_w, (2, 3, 1, 0))                   # (3,3,C,Cout)
    w_hwio = jnp.pad(w_hwio, ((0, 1), (0, 1), (0, 0), (0, N_pad - C_out)))
    w2 = w_hwio.reshape(2, 2, 2, 2, C, N_pad)                      # (dh,ph,dw,pw,C,N)
    w2 = jnp.transpose(w2, (0, 2, 1, 3, 4, 5)).reshape(4, K4, N_pad)
    w2 = w2.astype(jnp.bfloat16)

    # ---- fused epilogue vectors (bias / gamma / beta), f32, zero padded ----
    vec = jnp.stack([jnp.pad(conv_b, (0, N_pad - C_out)),
                     jnp.pad(ln_g, (0, N_pad - C_out)),
                     jnp.pad(ln_b, (0, N_pad - C_out))]).astype(jnp.float32)

    # ---- row-tile selection under a VMEM budget (double-buffered I/O) ----
    def need_bytes(d):
        m = d * Wc
        io = (d * Wc * K4 * 2                    # main input block
              + Wc * K4 * 2                      # halo block
              + 4 * K4 * N_pad * 2               # tap weights
              + 3 * N_pad * 4                    # bias/gamma/beta
              + d * W_out * N_pad * out_isize)   # output block
        scratch = (d + 1) * Wc * K4 * 2
        f32_tmp = 3 * m * N_pad * 4              # accumulator / epilogue temps
        return 2 * io + scratch + f32_tmp

    divs = [d for d in range(1, H_out + 1) if H_out % d == 0]
    ok = [d for d in divs
          if (d == H_out or (d * W_out) % 8 == 0) and need_bytes(d) <= vmem_budget_bytes]
    if not ok:
        tr = H_out                                # always spec-legal fallback
    elif B == 1 and H_out > 1:
        multi = [d for d in ok if H_out // d >= 2]   # keep both v7x TCs busy
        tr = max(multi) if multi else max(ok)
    else:
        tr = max(ok)
    n_rt = H_out // tr

    # <= 48 MiB so the request never exceeds a v7x core's physical VMEM.
    vmem_limit = int(min(48 << 20, max(32 << 20, need_bytes(tr) + (8 << 20))))

    flops = 8 * B * H_out * Wc * K4 * N_pad
    bytes_accessed = (y.size * 2 * (tr + 1) // tr + w2.size * 2 + vec.size * 4
                      + B * H_out * W_out * N_pad * out_isize)

    out = pl.pallas_call(
        functools.partial(_merge_kernel, C_out, W_out),
        out_shape=jax.ShapeDtypeStruct((B, H_out * W_out, N_pad), x.dtype),
        grid_spec=pltpu.PrefetchScalarGridSpec(
            num_scalar_prefetch=0,
            grid=(B, n_rt),
            in_specs=[
                # main tr-row slab of Y
                pl.BlockSpec((1, tr, Wc, K4), lambda b, r: (b, r, 0, 0)),
                # +1 halo row (same array, row-block size 1 -> row index)
                pl.BlockSpec((1, 1, Wc, K4), lambda b, r: (b, (r + 1) * tr, 0, 0)),
                # tap weights: constant index map -> fetched once, resident
                pl.BlockSpec((4, K4, N_pad), lambda b, r: (0, 0, 0)),
                # fused bias/gamma/beta
                pl.BlockSpec((3, N_pad), lambda b, r: (0, 0)),
            ],
            # flat, lane-dense output rows (no in-kernel 3-D relayout on store)
            out_specs=pl.BlockSpec((1, tr * W_out, N_pad), lambda b, r: (b, r, 0)),
            scratch_shapes=[pltpu.VMEM(((tr + 1) * Wc, K4), jnp.bfloat16)],
        ),
        compiler_params=pltpu.CompilerParams(
            dimension_semantics=("parallel", "parallel"),
            vmem_limit_bytes=vmem_limit,
        ),
        cost_estimate=pl.CostEstimate(
            flops=int(flops),
            transcendentals=int(B * H_out * W_out),
            bytes_accessed=int(bytes_accessed),
        ),
    )(y, y, w2, vec)

    if N_pad != C_out:                 # skip the slice when C_out % 128 == 0
        out = out[..., :C_out]
    return out


def init_params(key, dim, dim_out):
    k1, k2 = jax.random.split(key)
    fan_in = dim * 3 * 3
    bound = 1.0 / jnp.sqrt(fan_in)
    conv_w = jax.random.uniform(k1, (dim_out, dim, 3, 3), jnp.float32, -bound, bound)
    conv_b = jax.random.uniform(k2, (dim_out,), jnp.float32, -bound, bound)
    ln_g = jnp.ones((dim_out,), jnp.float32)
    ln_b = jnp.zeros((dim_out,), jnp.float32)
    return {"conv_w": conv_w, "conv_b": conv_b, "ln_g": ln_g, "ln_b": ln_b}


def reference_forward(x, spatial_shape, params):
    """Pure-JAX f32 reference (mirrors the PyTorch module)."""
    H, W = spatial_shape
    B, HW, C = x.shape
    x_nchw = jnp.transpose(x, (0, 2, 1)).reshape(B, C, H, W)
    y = jax.lax.conv_general_dilated(
        x_nchw, params["conv_w"], window_strides=(2, 2), padding=((1, 1), (1, 1)),
        dimension_numbers=("NCHW", "OIHW", "NCHW"),
    ) + params["conv_b"][None, :, None, None]
    B2, C2 = y.shape[:2]
    y = y.reshape(B2, C2, -1).transpose(0, 2, 1)
    mean = jnp.mean(y, axis=-1, keepdims=True)
    var = jnp.mean((y - mean) ** 2, axis=-1, keepdims=True)
    y = (y - mean) / jnp.sqrt(var + LN_EPS)
    return y * params["ln_g"] + params["ln_b"]


if __name__ == "__main__":
    key = jax.random.PRNGKey(0)
    k_x, k_p, k_x2, k_p2 = jax.random.split(key, 4)

    # Even spatial dims (primary small test).
    B, H, W = 2, 16, 16
    dim, dim_out = 16, 32
    x = jax.random.normal(k_x, (B, H * W, dim), jnp.float32)
    params = init_params(k_p, dim, dim_out)
    out = jax.block_until_ready(merge_block_forward(x, (H, W), params))
    ref = reference_forward(x, (H, W), params)
    assert out.shape == ref.shape, (out.shape, ref.shape)
    err = float(jnp.max(jnp.abs(out - ref)))
    # bf16 MXU operands (f32 accumulation) -> slightly looser tolerance than f32.
    assert jnp.allclose(out, ref, atol=3e-2, rtol=3e-2), f"even-case mismatch, max err={err}"

    # Odd spatial dims (exercises the zero-padded taps and ragged coarse width).
    B2, H2, W2 = 1, 15, 9
    dim2, dim_out2 = 8, 16
    x2 = jax.random.normal(k_x2, (B2, H2 * W2, dim2), jnp.float32)
    params2 = init_params(k_p2, dim2, dim_out2)
    out2 = jax.block_until_ready(merge_block_forward(x2, (H2, W2), params2))
    ref2 = reference_forward(x2, (H2, W2), params2)
    assert out2.shape == ref2.shape, (out2.shape, ref2.shape)
    err2 = float(jnp.max(jnp.abs(out2 - ref2)))
    assert jnp.allclose(out2, ref2, atol=3e-2, rtol=3e-2), f"odd-case mismatch, max err={err2}"

    print("KERNEL_OK")
</pallas_src>

<mosaic_0001>
module attributes {stable_mosaic.version = 11 : i64} {
  func.func @_merge_kernel(%arg0: i32, %arg1: i32, %arg2: memref<1x8x16x64xbf16, #tpu.memory_space<vmem>>, %arg3: memref<1x1x16x64xbf16, #tpu.memory_space<vmem>>, %arg4: memref<4x64x128xbf16, #tpu.memory_space<vmem>>, %arg5: memref<3x128xf32, #tpu.memory_space<vmem>>, %arg6: memref<1x64x128xf32, #tpu.memory_space<vmem>>, %arg7: memref<144x64xbf16, #tpu.memory_space<vmem>>) attributes {dimension_semantics = [#tpu.dimension_semantics<parallel>, #tpu.dimension_semantics<parallel>], iteration_bounds = array<i64: 2, 1>, scalar_prefetch = 0 : i64, scratch_operands = 1 : i64, tpu.core_type = #tpu.core_type<tc>, window_params = [{transform_indices = @transform_0, window_bounds = array<i64: 1, 8, 16, 64>}, {transform_indices = @transform_1, window_bounds = array<i64: 1, 1, 16, 64>}, {pipeline_mode = #tpu.pipeline_mode<synchronous>, transform_indices = @transform_2, window_bounds = array<i64: 4, 64, 128>}, {pipeline_mode = #tpu.pipeline_mode<synchronous>, transform_indices = @transform_3, window_bounds = array<i64: 3, 128>}, {transform_indices = @transform_4, window_bounds = array<i64: 1, 64, 128>}]} {
    %c0 = arith.constant 0 : index
    %c0_0 = arith.constant 0 : index
    %c0_1 = arith.constant 0 : index
    %c0_2 = arith.constant 0 : index
    %0 = vector.load %arg2[%c0, %c0_0, %c0_1, %c0_2] : memref<1x8x16x64xbf16, #tpu.memory_space<vmem>>, vector<1x8x16x64xbf16>
    %1 = vector.shape_cast %0 : vector<1x8x16x64xbf16> to vector<8x16x64xbf16>
    %2 = vector.shape_cast %1 : vector<8x16x64xbf16> to vector<128x64xbf16>
    %c0_3 = arith.constant 0 : index
    %c0_4 = arith.constant 0 : index
    %c0_5 = arith.constant 0 : index
    %c0_6 = arith.constant 0 : index
    %3 = vector.load %arg3[%c0_3, %c0_4, %c0_5, %c0_6] : memref<1x1x16x64xbf16, #tpu.memory_space<vmem>>, vector<1x1x16x64xbf16>
    %4 = vector.shape_cast %3 : vector<1x1x16x64xbf16> to vector<16x64xbf16>
    %5 = vector.extract_strided_slice %2 {offsets = [1, 0], sizes = [127, 64], strides = [1, 1]} : vector<128x64xbf16> to vector<127x64xbf16>
    %c0_7 = arith.constant 0 : index
    %c0_8 = arith.constant 0 : index
    %6 = vector.load %arg7[%c0_7, %c0_8] : memref<144x64xbf16, #tpu.memory_space<vmem>>, vector<127x64xbf16>
    tpu.vector_store %arg7[%c0_7, %c0_8], %5 {strides = array<i32>} : memref<144x64xbf16, #tpu.memory_space<vmem>>, vector<127x64xbf16>,
    %7 = vector.extract_strided_slice %4 {offsets = [1, 0], sizes = [15, 64], strides = [1, 1]} : vector<16x64xbf16> to vector<15x64xbf16>
    %c128 = arith.constant 128 : index
    %c0_9 = arith.constant 0 : index
    %8 = vector.load %arg7[%c128, %c0_9] : memref<144x64xbf16, #tpu.memory_space<vmem>>, vector<15x64xbf16>
    tpu.vector_store %arg7[%c128, %c0_9], %7 {strides = array<i32>} : memref<144x64xbf16, #tpu.memory_space<vmem>>, vector<15x64xbf16>,
    %c0_10 = arith.constant 0 : index
    %c0_11 = arith.constant 0 : index
    %c0_12 = arith.constant 0 : index
    %9 = vector.load %arg4[%c0_10, %c0_11, %c0_12] : memref<4x64x128xbf16, #tpu.memory_space<vmem>>, vector<1x64x128xbf16>
    %10 = vector.shape_cast %9 : vector<1x64x128xbf16> to vector<64x128xbf16>
    %cst = arith.constant dense<0.000000e+00> : vector<128x128xf32>
    %11 = tpu.matmul %2, %10, %cst {dimension_numbers = #tpu.dot_dimension_numbers<[1], [0], [0], [1], [0, 0, 1, 1], [], []>} : vector<128x64xbf16>, vector<64x128xbf16>, vector<128x128xf32> -> vector<128x128xf32>
    %c0_13 = arith.constant 0 : index
    %c0_14 = arith.constant 0 : index
    %12 = vector.load %arg7[%c0_13, %c0_14] : memref<144x64xbf16, #tpu.memory_space<vmem>>, vector<128x64xbf16>
    %c1 = arith.constant 1 : index
    %c0_15 = arith.constant 0 : index
    %c0_16 = arith.constant 0 : index
    %13 = vector.load %arg4[%c1, %c0_15, %c0_16] : memref<4x64x128xbf16, #tpu.memory_space<vmem>>, vector<1x64x128xbf16>
    %14 = vector.shape_cast %13 : vector<1x64x128xbf16> to vector<64x128xbf16>
    %cst_17 = arith.constant dense<0.000000e+00> : vector<128x128xf32>
    %15 = tpu.matmul %12, %14, %cst_17 {dimension_numbers = #tpu.dot_dimension_numbers<[1], [0], [0], [1], [0, 0, 1, 1], [], []>} : vector<128x64xbf16>, vector<64x128xbf16>, vector<128x128xf32> -> vector<128x128xf32>
    %16 = arith.addf %11, %15 : vector<128x128xf32>
    %17 = vector.extract_strided_slice %2 {offsets = [16, 0], sizes = [112, 64], strides = [1, 1]} : vector<128x64xbf16> to vector<112x64xbf16>
    %c2 = arith.constant 2 : index
    %c0_18 = arith.constant 0 : index
    %c0_19 = arith.constant 0 : index
    %18 = vector.load %arg4[%c2, %c0_18, %c0_19] : memref<4x64x128xbf16, #tpu.memory_space<vmem>>, vector<1x64x128xbf16>
    %19 = vector.shape_cast %18 : vector<1x64x128xbf16> to vector<64x128xbf16>
    %cst_20 = arith.constant dense<0.000000e+00> : vector<112x128xf32>
    %20 = tpu.matmul %17, %19, %cst_20 {dimension_numbers = #tpu.dot_dimension_numbers<[1], [0], [0], [1], [0, 0, 1, 1], [], []>} : vector<112x64xbf16>, vector<64x128xbf16>, vector<112x128xf32> -> vector<112x128xf32>
    %c16 = arith.constant 16 : index
    %c0_21 = arith.constant 0 : index
    %21 = vector.load %arg7[%c16, %c0_21] : memref<144x64xbf16, #tpu.memory_space<vmem>>, vector<112x64xbf16>
    %c3 = arith.constant 3 : index
    %c0_22 = arith.constant 0 : index
    %c0_23 = arith.constant 0 : index
    %22 = vector.load %arg4[%c3, %c0_22, %c0_23] : memref<4x64x128xbf16, #tpu.memory_space<vmem>>, vector<1x64x128xbf16>
    %23 = vector.shape_cast %22 : vector<1x64x128xbf16> to vector<64x128xbf16>
    %cst_24 = arith.constant dense<0.000000e+00> : vector<112x128xf32>
    %24 = tpu.matmul %21, %23, %cst_24 {dimension_numbers = #tpu.dot_dimension_numbers<[1], [0], [0], [1], [0, 0, 1, 1], [], []>} : vector<112x64xbf16>, vector<64x128xbf16>, vector<112x128xf32> -> vector<112x128xf32>
    %25 = arith.addf %20, %24 : vector<112x128xf32>
    %26 = vector.extract_strided_slice %16 {offsets = [0, 0], sizes = [112, 128], strides = [1, 1]} : vector<128x128xf32> to vector<112x128xf32>
    %27 = arith.addf %26, %25 : vector<112x128xf32>
    %28 = vector.shape_cast %27 : vector<112x128xf32> to vector<7x16x128xf32>
    %29 = vector.extract_strided_slice %28 {offsets = [0, 0, 0], sizes = [7, 8, 128], strides = [1, 1, 1]} : vector<7x16x128xf32> to vector<7x8x128xf32>
    %30 = vector.shape_cast %29 : vector<7x8x128xf32> to vector<56x128xf32>
    %c0_25 = arith.constant 0 : index
    %c0_26 = arith.constant 0 : index
    %31 = vector.load %arg5[%c0_25, %c0_26] : memref<3x128xf32, #tpu.memory_space<vmem>>, vector<1x128xf32>
    %32 = vector.broadcast %31 : vector<1x128xf32> to vector<56x128xf32>
    %33 = arith.addf %30, %32 : vector<56x128xf32>
    %cst_27 = arith.constant dense<0.000000e+00> : vector<56xf32>
    %34 = vector.multi_reduction <add>, %33, %cst_27 [1] : vector<56x128xf32> to vector<56xf32>
    %35 = vector.shape_cast %34 : vector<56xf32> to vector<56x1xf32>
    %cst_28 = arith.constant 3.125000e-02 : f32
    %36 = vector.broadcast %cst_28 : f32 to vector<56x1xf32>
    %37 = arith.mulf %35, %36 : vector<56x1xf32>
    %38 = vector.broadcast %37 : vector<56x1xf32> to vector<56x128xf32>
    %39 = arith.subf %33, %38 : vector<56x128xf32>
    %40 = arith.mulf %39, %39 : vector<56x128xf32>
    %cst_29 = arith.constant dense<0.000000e+00> : vector<56xf32>
    %41 = vector.multi_reduction <add>, %40, %cst_29 [1] : vector<56x128xf32> to vector<56xf32>
    %42 = vector.shape_cast %41 : vector<56xf32> to vector<56x1xf32>
    %cst_30 = arith.constant 9.600000e+01 : f32
    %43 = vector.broadcast %cst_30 : f32 to vector<56x1xf32>
    %44 = arith.mulf %43, %37 : vector<56x1xf32>
    %45 = arith.mulf %44, %37 : vector<56x1xf32>
    %46 = arith.subf %42, %45 : vector<56x1xf32>
    %cst_31 = arith.constant 3.125000e-02 : f32
    %47 = vector.broadcast %cst_31 : f32 to vector<56x1xf32>
    %48 = arith.mulf %46, %47 : vector<56x1xf32>
    %cst_32 = arith.constant 9.99999974E-6 : f32
    %49 = vector.broadcast %cst_32 : f32 to vector<56x1xf32>
    %50 = arith.addf %48, %49 : vector<56x1xf32>
    %51 = math.rsqrt %50 : vector<56x1xf32>
    %c1_33 = arith.constant 1 : index
    %c0_34 = arith.constant 0 : index
    %52 = vector.load %arg5[%c1_33, %c0_34] : memref<3x128xf32, #tpu.memory_space<vmem>>, vector<1x128xf32>
    %53 = vector.broadcast %51 : vector<56x1xf32> to vector<56x128xf32>
    %54 = vector.broadcast %52 : vector<1x128xf32> to vector<56x128xf32>
    %55 = arith.mulf %53, %54 : vector<56x128xf32>
    %56 = arith.mulf %39, %55 : vector<56x128xf32>
    %c2_35 = arith.constant 2 : index
    %c0_36 = arith.constant 0 : index
    %57 = vector.load %arg5[%c2_35, %c0_36] : memref<3x128xf32, #tpu.memory_space<vmem>>, vector<1x128xf32>
    %58 = vector.broadcast %57 : vector<1x128xf32> to vector<56x128xf32>
    %59 = arith.addf %56, %58 : vector<56x128xf32>
    %c0_37 = arith.constant 0 : index
    %c0_38 = arith.constant 0 : index
    %c0_39 = arith.constant 0 : index
    %60 = vector.load %arg6[%c0_37, %c0_38, %c0_39] : memref<1x64x128xf32, #tpu.memory_space<vmem>>, vector<1x56x128xf32>
    %61 = vector.shape_cast %60 : vector<1x56x128xf32> to vector<56x128xf32>
    %62 = vector.shape_cast %59 : vector<56x128xf32> to vector<1x56x128xf32>
    tpu.vector_store %arg6[%c0_37, %c0_38, %c0_39], %62 {strides = array<i32>} : memref<1x64x128xf32, #tpu.memory_space<vmem>>, vector<1x56x128xf32>,
    %c2_40 = arith.constant 2 : index
    %c0_41 = arith.constant 0 : index
    %c0_42 = arith.constant 0 : index
    %63 = vector.load %arg4[%c2_40, %c0_41, %c0_42] : memref<4x64x128xbf16, #tpu.memory_space<vmem>>, vector<1x64x128xbf16>
    %64 = vector.shape_cast %63 : vector<1x64x128xbf16> to vector<64x128xbf16>
    %cst_43 = arith.constant dense<0.000000e+00> : vector<16x128xf32>
    %65 = tpu.matmul %4, %64, %cst_43 {dimension_numbers = #tpu.dot_dimension_numbers<[1], [0], [0], [1], [0, 0, 1, 1], [], []>} : vector<16x64xbf16>, vector<64x128xbf16>, vector<16x128xf32> -> vector<16x128xf32>
    %c128_44 = arith.constant 128 : index
    %c0_45 = arith.constant 0 : index
    %66 = vector.load %arg7[%c128_44, %c0_45] : memref<144x64xbf16, #tpu.memory_space<vmem>>, vector<16x64xbf16>
    %c3_46 = arith.constant 3 : index
    %c0_47 = arith.constant 0 : index
    %c0_48 = arith.constant 0 : index
    %67 = vector.load %arg4[%c3_46, %c0_47, %c0_48] : memref<4x64x128xbf16, #tpu.memory_space<vmem>>, vector<1x64x128xbf16>
    %68 = vector.shape_cast %67 : vector<1x64x128xbf16> to vector<64x128xbf16>
    %cst_49 = arith.constant dense<0.000000e+00> : vector<16x128xf32>
    %69 = tpu.matmul %66, %68, %cst_49 {dimension_numbers = #tpu.dot_dimension_numbers<[1], [0], [0], [1], [0, 0, 1, 1], [], []>} : vector<16x64xbf16>, vector<64x128xbf16>, vector<16x128xf32> -> vector<16x128xf32>
    %70 = arith.addf %65, %69 : vector<16x128xf32>
    %71 = vector.extract_strided_slice %16 {offsets = [112, 0], sizes = [16, 128], strides = [1, 1]} : vector<128x128xf32> to vector<16x128xf32>
    %72 = arith.addf %71, %70 : vector<16x128xf32>
    %73 = vector.shape_cast %72 : vector<16x128xf32> to vector<1x16x128xf32>
    %74 = vector.extract_strided_slice %73 {offsets = [0, 0, 0], sizes = [1, 8, 128], strides = [1, 1, 1]} : vector<1x16x128xf32> to vector<1x8x128xf32>
    %75 = vector.shape_cast %74 : vector<1x8x128xf32> to vector<8x128xf32>
    %c0_50 = arith.constant 0 : index
    %c0_51 = arith.constant 0 : index
    %76 = vector.load %arg5[%c0_50, %c0_51] : memref<3x128xf32, #tpu.memory_space<vmem>>, vector<1x128xf32>
    %77 = vector.broadcast %76 : vector<1x128xf32> to vector<8x128xf32>
    %78 = arith.addf %75, %77 : vector<8x128xf32>
    %cst_52 = arith.constant dense<0.000000e+00> : vector<8xf32>
    %79 = vector.multi_reduction <add>, %78, %cst_52 [1] : vector<8x128xf32> to vector<8xf32>
    %80 = vector.shape_cast %79 : vector<8xf32> to vector<8x1xf32>
    %cst_53 = arith.constant 3.125000e-02 : f32
    %81 = vector.broadcast %cst_53 : f32 to vector<8x1xf32>
    %82 = arith.mulf %80, %81 : vector<8x1xf32>
    %83 = vector.broadcast %82 : vector<8x1xf32> to vector<8x128xf32>
    %84 = arith.subf %78, %83 : vector<8x128xf32>
    %85 = arith.mulf %84, %84 : vector<8x128xf32>
    %cst_54 = arith.constant dense<0.000000e+00> : vector<8xf32>
    %86 = vector.multi_reduction <add>, %85, %cst_54 [1] : vector<8x128xf32> to vector<8xf32>
    %87 = vector.shape_cast %86 : vector<8xf32> to vector<8x1xf32>
    %cst_55 = arith.constant 9.600000e+01 : f32
    %88 = vector.broadcast %cst_55 : f32 to vector<8x1xf32>
    %89 = arith.mulf %88, %82 : vector<8x1xf32>
    %90 = arith.mulf %89, %82 : vector<8x1xf32>
    %91 = arith.subf %87, %90 : vector<8x1xf32>
    %cst_56 = arith.constant 3.125000e-02 : f32
    %92 = vector.broadcast %cst_56 : f32 to vector<8x1xf32>
    %93 = arith.mulf %91, %92 : vector<8x1xf32>
    %cst_57 = arith.constant 9.99999974E-6 : f32
    %94 = vector.broadcast %cst_57 : f32 to vector<8x1xf32>
    %95 = arith.addf %93, %94 : vector<8x1xf32>
    %96 = math.rsqrt %95 : vector<8x1xf32>
    %c1_58 = arith.constant 1 : index
    %c0_59 = arith.constant 0 : index
    %97 = vector.load %arg5[%c1_58, %c0_59] : memref<3x128xf32, #tpu.memory_space<vmem>>, vector<1x128xf32>
    %98 = vector.broadcast %96 : vector<8x1xf32> to vector<8x128xf32>
    %99 = vector.broadcast %97 : vector<1x128xf32> to vector<8x128xf32>
    %100 = arith.mulf %98, %99 : vector<8x128xf32>
    %101 = arith.mulf %84, %100 : vector<8x128xf32>
    %c2_60 = arith.constant 2 : index
    %c0_61 = arith.constant 0 : index
    %102 = vector.load %arg5[%c2_60, %c0_61] : memref<3x128xf32, #tpu.memory_space<vmem>>, vector<1x128xf32>
    %103 = vector.broadcast %102 : vector<1x128xf32> to vector<8x128xf32>
    %104 = arith.addf %101, %103 : vector<8x128xf32>
    %c0_62 = arith.constant 0 : index
    %c56 = arith.constant 56 : index
    %c0_63 = arith.constant 0 : index
    %105 = vector.load %arg6[%c0_62, %c56, %c0_63] : memref<1x64x128xf32, #tpu.memory_space<vmem>>, vector<1x8x128xf32>
    %106 = vector.shape_cast %105 : vector<1x8x128xf32> to vector<8x128xf32>
    %107 = vector.shape_cast %104 : vector<8x128xf32> to vector<1x8x128xf32>
    tpu.vector_store %arg6[%c0_62, %c56, %c0_63], %107 {strides = array<i32>} : memref<1x64x128xf32, #tpu.memory_space<vmem>>, vector<1x8x128xf32>,
    return
  }
  func.func @transform_0(%arg0: i32, %arg1: i32) -> (i32, i32, i32, i32) {
    %c0_i32 = arith.constant 0 : i32
    %c0_i32_0 = arith.constant 0 : i32
    %c0_i32_1 = arith.constant 0 : i32
    return %arg0, %arg1, %c0_i32, %c0_i32_0 : i32, i32, i32, i32
  }
  func.func @transform_1(%arg0: i32, %arg1: i32) -> (i32, i32, i32, i32) {
    %c1_i32 = arith.constant 1 : i32
    %0 = arith.addi %arg1, %c1_i32 : i32
    %c8_i32 = arith.constant 8 : i32
    %1 = arith.muli %0, %c8_i32 : i32
    %c0_i32 = arith.constant 0 : i32
    %c0_i32_0 = arith.constant 0 : i32
    %c0_i32_1 = arith.constant 0 : i32
    return %arg0, %1, %c0_i32, %c0_i32_0 : i32, i32, i32, i32
  }
  func.func @transform_2(%arg0: i32, %arg1: i32) -> (i32, i32, i32) {
    %c0_i32 = arith.constant 0 : i32
    %c0_i32_0 = arith.constant 0 : i32
    %c0_i32_1 = arith.constant 0 : i32
    %c0_i32_2 = arith.constant 0 : i32
    return %c0_i32, %c0_i32_0, %c0_i32_1 : i32, i32, i32
  }
  func.func @transform_3(%arg0: i32, %arg1: i32) -> (i32, i32) {
    %c0_i32 = arith.constant 0 : i32
    %c0_i32_0 = arith.constant 0 : i32
    %c0_i32_1 = arith.constant 0 : i32
    return %c0_i32, %c0_i32_0 : i32, i32
  }
  func.func @transform_4(%arg0: i32, %arg1: i32) -> (i32, i32, i32) {
    %c0_i32 = arith.constant 0 : i32
    %c0_i32_0 = arith.constant 0 : i32
    return %arg0, %arg1, %c0_i32 : i32, i32, i32
  }
}

</mosaic_0001>

<llo_original>
// kernel: tpu_custom_call.1
$region0: #{tpu_custom_call.1}
  #allocation0 [shape = 'u32[]', space=smem, size = 0x4, offset = 0x4, fixed_abs, tag = 'smem constant byte address 0x4 - core index']
  #allocation1 [shape = 'u32[72,128]{1,0:T(1,128)}', space=vmem, size = 0x9000, scoped, tag = 'internal scratch']
  #allocation2 [shape = 'bf16[144,64]{1,0:T(8,128)(2,1)}', space=vmem, size = 0x9000, scoped, tag = 'scratch operand']
  %s0 = inlined_call_operand.hbm [shape: bf16[2,9,16,64], index: 0, kind: input, shape index: {}]
  %s1 = inlined_call_operand.hbm [shape: bf16[2,9,16,64], index: 1, kind: input, shape index: {}]
  %s2 = inlined_call_operand.hbm [shape: bf16[4,64,128], index: 2, kind: input, shape index: {}]
  %s3 = inlined_call_operand.hbm [shape: f32[3,128], index: 3, kind: input, shape index: {}]
  %s4 = inlined_call_operand.hbm [shape: f32[2,64,128], index: 4, kind: output, shape index: {}]
  %s5 = sld [smem:[#allocation0]]
  $region65: #{tpu_custom_call.1} parent=0
    _
  %s7 = ssub.s32 1, %s5
  %s8 = scalar_select 0, %s7, %s5
  $region1: #{tpu_custom_call.1} parent=0
    #allocation3 [shape = 'u8[65536]{0}', space=vmem, size = 0x10000, scoped, tag = 'input window, operand 0']
    #allocation4 [shape = 's32[2]{0}', space=sflag, size = 0x8, scoped, tag = 'scoped memory for tpu_custom_call.1']
    #allocation5 [shape = 's32[2]{0}', space=sflag, size = 0x8, scoped, tag = 'scoped memory for tpu_custom_call.1']
    #allocation6 [shape = 'u8[8192]{0}', space=vmem, size = 0x2000, scoped, tag = 'input window, operand 1']
    #allocation7 [shape = 's32[2]{0}', space=sflag, size = 0x8, scoped, tag = 'scoped memory for tpu_custom_call.1']
    #allocation8 [shape = 'u8[65536]{0}', space=vmem, size = 0x10000, scoped, tag = 'input window, operand 2, single buffered']
    #allocation9 [shape = 'u8[2048]{0}', space=vmem, size = 0x800, scoped, tag = 'input window, operand 3, single buffered']
    #allocation10 [shape = 's32[1]{0}', space=sflag, size = 0x4, scoped, tag = 'scoped memory for tpu_custom_call.1']
    #allocation11 [shape = 'u8[65536]{0}', space=vmem, size = 0x10000, scoped, tag = 'output window, operand 0']
    %9 = vsyncpa [#allocation4], 0
    %s10 = scalar_lea.sflag [#allocation4], 1
    %11 = vsyncpa %s10, 0
    %12 = vsyncpa [#allocation7], 0
    %s13 = scalar_lea.sflag [#allocation7], 1
    %14 = vsyncpa %s13, 0
    %15 = vsyncpa [#allocation10], 0
    %16 = vsyncpa [#allocation5], 0
    %s17 = scalar_lea.sflag [#allocation5], 1
    %18 = vsyncpa %s17, 0
    loop: start=0, step=1, limit=4
    $region2: #{tpu_custom_call.1} parent=1 // loop_pre_header
      _
    $region3: #{tpu_custom_call.1} parent=1 // loop_header
      %s20 = sphi 0, %s24
      %p21 = scmp.ge.s32.totalorder %s20, 4
      %s27 = sphi 0, %s39
      %s28 = sphi 0, %s35
      %s29 = sphi 0, %s27
      %s30 = sphi 0, %s28
      %s31 = sphi 0, %s29
      %s32 = sphi 0, %s30
      %s44 = sphi 0, %s46
      %s47 = sphi 0, %s44
      %s48 = sphi 0, %s47
      %s64 = sphi 0, %s48
      %s76 = sphi 0, %s78
      %s79 = sphi 0, %s76
      %s80 = sphi 0, %s79
      %s96 = sphi 0, %s80
      %s100 = sphi 0, %s100
      %s102 = sphi 0, %s100
      %s103 = sphi 0, %s102
      %s117 = sphi 0, %s103
      %s121 = sphi 0, %s121
      %s123 = sphi 0, %s121
      %s124 = sphi 0, %s123
      %s138 = sphi 0, %s124
      %s146 = sphi 0, %s148
      %s149 = sphi 0, %s146
      %s150 = sphi 0, %s149
      %s166 = sphi 0, %s150
    $region4: #{tpu_custom_call.1} parent=1 // loop_header_branch
      %23 = sbr.rel (%p21) target = $region8
    $region5: #{tpu_custom_call.1} parent=1 // loop_body
      %s25 = ssub.s32 %s20, 1
      %s26 = ssub.s32 %s20, 2
      %s33 = sadd.s32 1, %s28
      %p34 = scmp.ge.s32.totalorder %s33, 1
      %s35 = scalar_select %p34, 0, %s33
      %s36 = sadd.s32 1, %s27
      %s37 = scalar_select %p34, %s36, %s27
      %p38 = scmp.ge.s32.totalorder %s37, 2
      %s39 = scalar_select %p38, 0, %s37
      %s40 = ssub.s32 %s27, %s39
      %s41 = ssub.s32 %s28, %s35
      %s42 = sor.u32 %s40, %s41
      %p43 = scmp.eq.s32.totalorder %s42, 0
      %s45 = sadd.s32 %s44, 1
      %s46 = scalar_select %p43, %s44, %s45
      %p49 = pneg %p43
      %p50 = scmp.eq.s32.totalorder %s20, 1
      %p51 = por %p49, %p50
      %p52 = scmp.ne.s32.totalorder %s44, %s47
      %p53 = scmp.eq.s32.totalorder %s20, 0
      %p54 = por %p52, %p53
      %p55 = scmp.ne.s32.totalorder %s44, %s47
      %p56 = scmp.eq.s32.totalorder %s25, 1
      %p57 = por %p55, %p56
      %p58 = scmp.ne.s32.totalorder %s47, %s48
      %p59 = scmp.eq.s32.totalorder %s25, 0
      %p60 = por %p58, %p59
      %p61 = scmp.ne.s32.totalorder %s47, %s48
      %p62 = scmp.eq.s32.totalorder %s26, 1
      %p63 = por %p61, %p62
      %p65 = scmp.ne.s32.totalorder %s48, %s64
      %p66 = scmp.eq.s32.totalorder %s26, 0
      %p67 = por %p65, %p66
      %s68 = sadd.s32 %s28, 1
      %s69 = smul.u32 %s68, 8
      %s70 = sadd.s32 %s35, 1
      %s71 = smul.u32 %s70, 8
      %s72 = ssub.s32 %s27, %s39
      %s73 = ssub.s32 %s69, %s71
      %s74 = sor.u32 %s72, %s73
      %p75 = scmp.eq.s32.totalorder %s74, 0
      %s77 = sadd.s32 %s76, 1
      %s78 = scalar_select %p75, %s76, %s77
      %p81 = pneg %p75
      %p82 = scmp.eq.s32.totalorder %s20, 1
      %p83 = por %p81, %p82
      %p84 = scmp.ne.s32.totalorder %s76, %s79
      %p85 = scmp.eq.s32.totalorder %s20, 0
      %p86 = por %p84, %p85
      %p87 = scmp.ne.s32.totalorder %s76, %s79
      %p88 = scmp.eq.s32.totalorder %s25, 1
      %p89 = por %p87, %p88
      %p90 = scmp.ne.s32.totalorder %s79, %s80
      %p91 = scmp.eq.s32.totalorder %s25, 0
      %p92 = por %p90, %p91
      %p93 = scmp.ne.s32.totalorder %s79, %s80
      %p94 = scmp.eq.s32.totalorder %s26, 1
      %p95 = por %p93, %p94
      %p97 = scmp.ne.s32.totalorder %s80, %s96
      %p98 = scmp.eq.s32.totalorder %s26, 0
      %p99 = por %p97, %p98
      %s101 = sadd.s32 %s100, 1
      %p104 = scmp.eq.s32.totalorder %s20, 1
      %p105 = scmp.ne.s32.totalorder %s100, %s102
      %p106 = scmp.eq.s32.totalorder %s20, 0
      %p107 = por %p105, %p106
      %p108 = scmp.ne.s32.totalorder %s100, %s102
      %p109 = scmp.eq.s32.totalorder %s25, 1
      %p110 = por %p108, %p109
      %p111 = scmp.ne.s32.totalorder %s102, %s103
      %p112 = scmp.eq.s32.totalorder %s25, 0
      %p113 = por %p111, %p112
      %p114 = scmp.ne.s32.totalorder %s102, %s103
      %p115 = scmp.eq.s32.totalorder %s26, 1
      %p116 = por %p114, %p115
      %p118 = scmp.ne.s32.totalorder %s103, %s117
      %p119 = scmp.eq.s32.totalorder %s26, 0
      %p120 = por %p118, %p119
      %s122 = sadd.s32 %s121, 1
      %p125 = scmp.eq.s32.totalorder %s20, 1
      %p126 = scmp.ne.s32.totalorder %s121, %s123
      %p127 = scmp.eq.s32.totalorder %s20, 0
      %p128 = por %p126, %p127
      %p129 = scmp.ne.s32.totalorder %s121, %s123
      %p130 = scmp.eq.s32.totalorder %s25, 1
      %p131 = por %p129, %p130
      %p132 = scmp.ne.s32.totalorder %s123, %s124
      %p133 = scmp.eq.s32.totalorder %s25, 0
      %p134 = por %p132, %p133
      %p135 = scmp.ne.s32.totalorder %s123, %s124
      %p136 = scmp.eq.s32.totalorder %s26, 1
      %p137 = por %p135, %p136
      %p139 = scmp.ne.s32.totalorder %s124, %s138
      %p140 = scmp.eq.s32.totalorder %s26, 0
      %p141 = por %p139, %p140
      %s142 = ssub.s32 %s27, %s39
      %s143 = ssub.s32 %s28, %s35
      %s144 = sor.u32 %s142, %s143
      %p145 = scmp.eq.s32.totalorder %s144, 0
      %s147 = sadd.s32 %s146, 1
      %s148 = scalar_select %p145, %s146, %s147
      %p151 = pneg %p145
      %p152 = scmp.eq.s32.totalorder %s20, 1
      %p153 = por %p151, %p152
      %p154 = scmp.ne.s32.totalorder %s146, %s149
      %p155 = scmp.eq.s32.totalorder %s20, 0
      %p156 = por %p154, %p155
      %p157 = scmp.ne.s32.totalorder %s146, %s149
      %p158 = scmp.eq.s32.totalorder %s25, 1
      %p159 = por %p157, %p158
      %p160 = scmp.ne.s32.totalorder %s149, %s150
      %p161 = scmp.eq.s32.totalorder %s25, 0
      %p162 = por %p160, %p161
      %p163 = scmp.ne.s32.totalorder %s149, %s150
      %p164 = scmp.eq.s32.totalorder %s26, 1
      %p165 = por %p163, %p164
      %p167 = scmp.ne.s32.totalorder %s150, %s166
      %p168 = scmp.eq.s32.totalorder %s26, 0
      %p169 = por %p167, %p168
      %p170 = scmp.le.s32.totalorder 1, %s20
      %p171 = scmp.lt.s32.totalorder %s20, 3
      %p172 = pnand %p170, %p171
      %p173 = pneg %p172
      // Predicated region
      $region9: #{tpu_custom_call.1} parent=5 // pred_check
        _
      $region10: #{tpu_custom_call.1} parent=5 // pred_check_branch
        %175 = sbr.rel (%p172) target = $region12
      $region11: #{tpu_custom_call.1} parent=5 // pred_region
        %s176 = ssub.s32 %s20, 1
        // Predicated region
        $region13: #{tpu_custom_call.1} parent=11 // pred_check
          %p177 = pneg %p113
        $region14: #{tpu_custom_call.1} parent=11 // pred_check_branch
          %179 = sbr.rel (%p177) target = $region16
        $region15: #{tpu_custom_call.1} parent=11 // pred_region
          %181 = vsyncadd [#allocation7], 0
          %s182 = sshll.u32 %s2, 4
          %s183 = int_to_ptr.hbm [resolvable:$true] %s182
          %s184 = sshll.u32 [#allocation8], 4
          %s185 = int_to_ptr.vmem [resolvable:$true] %s184
          %190 = dma.hbm_to_vmem [thread:$0]  %s183, 2048, %s185, [#allocation7], 64, 64, 4
        $region16: #{tpu_custom_call.1} parent=11 // pred_fallthru
          _
        // Predicated region
        $region17: #{tpu_custom_call.1} parent=11 // pred_check
          %p191 = pneg %p134
        $region18: #{tpu_custom_call.1} parent=11 // pred_check_branch
          %193 = sbr.rel (%p191) target = $region20
        $region19: #{tpu_custom_call.1} parent=11 // pred_region
          %195 = vsyncadd [#allocation10], 0
          %s197 = sshll.u32 %s3, 4
          %s198 = int_to_ptr.hbm [resolvable:$true] %s197
          %s199 = sshll.u32 [#allocation9], 4
          %s200 = int_to_ptr.vmem [resolvable:$true] %s199
          %202 = dma.hbm_to_vmem [thread:$0]  %s198, 64, %s200, [#allocation10]
        $region20: #{tpu_custom_call.1} parent=11 // pred_fallthru
          _
      $region12: #{tpu_custom_call.1} parent=5 // pred_fallthru
        _
      %p203 = scmp.lt.s32.totalorder %s20, 2
      // Predicated region
      $region21: #{tpu_custom_call.1} parent=5 // pred_check
        %p204 = pneg %p203
      $region22: #{tpu_custom_call.1} parent=5 // pred_check_branch
        %206 = sbr.rel (%p204) target = $region24
      $region23: #{tpu_custom_call.1} parent=5 // pred_region
        // Predicated region
        $region25: #{tpu_custom_call.1} parent=23 // pred_check
          %p207 = pneg %p54
        $region26: #{tpu_custom_call.1} parent=23 // pred_check_branch
          %209 = sbr.rel (%p207) target = $region28
        $region27: #{tpu_custom_call.1} parent=23 // pred_region
          %s210 = sand.u32 %s44, 1
          %s211 = scalar_lea.sflag [#allocation4], %s210
          %s212 = sand.u32 %s44, 1
          %s213 = smul.addr %s212, 64
          %s214 = scalar_lea.vmem [#allocation3], %s213
          %s215 = smul.u32 8, %s28
          %s216 = ssub.s32 9, %s215
          %p217 = scmp.lt.s32.totalorder %s216, 8
          %s218 = scalar_select %p217, %s216, 8
          %s219 = smul.u32 4, %s218
          %s220 = smul.u32 %s219, 2
          %s221 = ssub.s32 64, %s220
          %s222 = sshll.u32 %s221, 4
          %223 = vsyncadd %s211, %s222
          %p224 = scmp.ne.s32.totalorder 0, %s220
          %s225 = smul.addr %s215, 2
          %s226 = smul.addr %s27, 18
          %s227 = sadd.s32 %s225, %s226
          %s228 = smul.addr %s227, 4
          %s229 = scalar_lea.hbm %s0, %s228
          %s230 = smul.u32 %s218, 2
          %s231 = smul.u32 4, %s230
          %s232 = sshll.u32 %s229, 4
          %s233 = int_to_ptr.hbm [resolvable:$true] %s232
          %s234 = sshll.u32 %s214, 4
          %s235 = int_to_ptr.vmem [resolvable:$true] %s234
          %s236 = sshll.u32 %s231, 4
          %240 = dma.hbm_to_vmem [thread:$0]  (%p224), %s233, %s236, %s235, %s211, 64, 64, 4
        $region28: #{tpu_custom_call.1} parent=23 // pred_fallthru
          _
        // Predicated region
        $region29: #{tpu_custom_call.1} parent=23 // pred_check
          %p241 = pneg %p86
        $region30: #{tpu_custom_call.1} parent=23 // pred_check_branch
          %243 = sbr.rel (%p241) target = $region32
        $region31: #{tpu_custom_call.1} parent=23 // pred_region
          %s244 = sand.u32 %s20, 1
          %s245 = scalar_lea.sflag [#allocation7], %s244
          %s246 = sand.u32 %s76, 1
          %s247 = smul.addr %s246, 8
          %s248 = scalar_lea.vmem [#allocation6], %s247
          %s249 = sadd.s32 %s28, 1
          %s250 = smul.u32 %s249, 8
          %252 = vsyncadd %s245, 0
          %s253 = smul.addr %s250, 2
          %s254 = smul.addr %s27, 18
          %s255 = sadd.s32 %s253, %s254
          %s256 = smul.addr %s255, 4
          %s257 = scalar_lea.hbm %s1, %s256
          %s258 = sshll.u32 %s257, 4
          %s259 = int_to_ptr.hbm [resolvable:$true] %s258
          %s260 = sshll.u32 %s248, 4
          %s261 = int_to_ptr.vmem [resolvable:$true] %s260
          %266 = dma.hbm_to_vmem [thread:$0]  %s259, 128, %s261, %s245, 64, 64, 4
        $region32: #{tpu_custom_call.1} parent=23 // pred_fallthru
          _
      $region24: #{tpu_custom_call.1} parent=5 // pred_fallthru
        _
      %p267 = scmp.le.s32.totalorder 1, %s20
      %p268 = scmp.lt.s32.totalorder %s20, 3
      %p269 = pnand %p267, %p268
      %p270 = pneg %p269
      // Predicated region
      $region33: #{tpu_custom_call.1} parent=5 // pred_check
        _
      $region34: #{tpu_custom_call.1} parent=5 // pred_check_branch
        %272 = sbr.rel (%p269) target = $region36
      $region35: #{tpu_custom_call.1} parent=5 // pred_region
        %s273 = ssub.s32 %s20, 1
        %s274 = sand.u32 %s47, 1
        %s275 = scalar_lea.sflag [#allocation4], %s274
        %s276 = sand.u32 %s47, 1
        %s277 = smul.addr %s276, 64
        %s278 = scalar_lea.vmem [#allocation3], %s277
        // Predicated region
        $region37: #{tpu_custom_call.1} parent=35 // pred_check
          %p279 = pneg %p60
        $region38: #{tpu_custom_call.1} parent=35 // pred_check_branch
          %281 = sbr.rel (%p279) target = $region40
        $region39: #{tpu_custom_call.1} parent=35 // pred_region
          %283 = dma.done %s275, 1024
        $region40: #{tpu_custom_call.1} parent=35 // pred_fallthru
          _
        %s284 = sand.u32 %s25, 1
        %s285 = scalar_lea.sflag [#allocation7], %s284
        %s286 = sand.u32 %s79, 1
        %s287 = smul.addr %s286, 8
        %s288 = scalar_lea.vmem [#allocation6], %s287
        // Predicated region
        $region41: #{tpu_custom_call.1} parent=35 // pred_check
          %p289 = pneg %p92
        $region42: #{tpu_custom_call.1} parent=35 // pred_check_branch
          %291 = sbr.rel (%p289) target = $region44
        $region43: #{tpu_custom_call.1} parent=35 // pred_region
          %293 = dma.done %s285, 128
        $region44: #{tpu_custom_call.1} parent=35 // pred_fallthru
          _
        // Predicated region
        $region45: #{tpu_custom_call.1} parent=35 // pred_check
          %p294 = pneg %p113
        $region46: #{tpu_custom_call.1} parent=35 // pred_check_branch
          %296 = sbr.rel (%p294) target = $region48
        $region47: #{tpu_custom_call.1} parent=35 // pred_region
          %298 = dma.done [#allocation7], 2048
        $region48: #{tpu_custom_call.1} parent=35 // pred_fallthru
          _
        // Predicated region
        $region49: #{tpu_custom_call.1} parent=35 // pred_check
          %p299 = pneg %p134
        $region50: #{tpu_custom_call.1} parent=35 // pred_check_branch
          %301 = sbr.rel (%p299) target = $region52
        $region51: #{tpu_custom_call.1} parent=35 // pred_region
          %303 = dma.done [#allocation10], 64
        $region52: #{tpu_custom_call.1} parent=35 // pred_fallthru
          _
        %s304 = sand.u32 %s47, 1
        %s305 = scalar_lea.sflag [#allocation4], %s304
        %s306 = sand.u32 %s47, 1
        %s307 = smul.addr %s306, 64
        %s308 = scalar_lea.vmem [#allocation3], %s307
        %p309 = pneg %p60
        %p310 = pneg %p57
        %s311 = sand.u32 %s25, 1
        %s312 = scalar_lea.sflag [#allocation7], %s311
        %s313 = sand.u32 %s79, 1
        %s314 = smul.addr %s313, 8
        %s315 = scalar_lea.vmem [#allocation6], %s314
        %p316 = pneg %p92
        %p317 = pneg %p89
        %p318 = pneg %p113
        %p319 = pneg %p110
        %p320 = pneg %p134
        %p321 = pneg %p131
        %p322 = pneg %p162
        %p323 = pneg %p159
        %s324 = sand.u32 %s149, 1
        %s325 = scalar_lea.sflag [#allocation5], %s324
        %s326 = sand.u32 %s149, 1
        %s327 = smul.addr %s326, 64
        %s328 = scalar_lea.vmem [#allocation11], %s327
        %s329 = smul.u32 8, %s30
        %s330 = ssub.s32 9, %s329
        %p331 = scmp.lt.s32.totalorder %s330, 8
        %s332 = scalar_select %p331, %s330, 8
        %s333 = smul.u32 4, %s332
        %s334 = smul.u32 %s333, 2
        %s335 = sadd.s32 %s30, 1
        %s336 = smul.u32 %s335, 8
        %s337 = smul.u32 8, %s30
        %v339 = vld [vmem:[%s278] sm:$0xf]
        %v340 = vld [vmem:[%s278 + $0x4] sm:$0xf]
        %v341 = vld [vmem:[%s278 + $0x8] sm:$0xf]
        %v342 = vld [vmem:[%s278 + $0xc] sm:$0xf]
        %v343 = vld [vmem:[%s278 + $0x10] sm:$0xf]
        %v344 = vld [vmem:[%s278 + $0x14] sm:$0xf]
        %v345 = vld [vmem:[%s278 + $0x18] sm:$0xf]
        %v346 = vld [vmem:[%s278 + $0x1c] sm:$0xf]
        %v347 = vld [vmem:[%s278 + $0x20] sm:$0xf]
        %v348 = vld [vmem:[%s278 + $0x24] sm:$0xf]
        %v349 = vld [vmem:[%s278 + $0x28] sm:$0xf]
        %v350 = vld [vmem:[%s278 + $0x2c] sm:$0xf]
        %v351 = vld [vmem:[%s278 + $0x30] sm:$0xf]
        %v352 = vld [vmem:[%s278 + $0x34] sm:$0xf]
        %v353 = vld [vmem:[%s278 + $0x38] sm:$0xf]
        %v354 = vld [vmem:[%s278 + $0x3c] sm:$0xf]
        %v355 = vld [vmem:[%s288] sm:$0xf]
        %v356 = vld [vmem:[%s288 + $0x4] sm:$0xf]
        %vm357 = vsmask.f32 3328
        %vm358 = vsmask.f32 7440
        %vm359 = vmor %vm357, %vm358
        %v361 = vshrl.u32 %v339, 16
        %v363 = vrot.slane %v361, 4
        %v364 = vshll.u32 %v339, 16
        %v366 = vrot.slane %v364, 5
        %v367 = vor.u32 %v363, %v366
        %v368 = vrot.slane %v367, 4
        %v370 = vshll.u32 %v340, 16
        %v372 = vrot.slane %v370, 5
        %v373 = vsel %vm359, %v368, %v372
        %v374 = vshrl.u32 %v340, 16
        %v376 = vrot.slane %v374, 4
        %v377 = vor.u32 %v376, %v372
        %v378 = vrot.slane %v377, 4
        %v380 = vshll.u32 %v341, 16
        %v382 = vrot.slane %v380, 5
        %v383 = vsel %vm359, %v378, %v382
        %v384 = vshrl.u32 %v341, 16
        %v386 = vrot.slane %v384, 4
        %v387 = vor.u32 %v386, %v382
        %v388 = vrot.slane %v387, 4
        %v390 = vshll.u32 %v342, 16
        %v392 = vrot.slane %v390, 5
        %v393 = vsel %vm359, %v388, %v392
        %v394 = vshrl.u32 %v342, 16
        %v396 = vrot.slane %v394, 4
        %v397 = vor.u32 %v396, %v392
        %v398 = vrot.slane %v397, 4
        %v400 = vshll.u32 %v343, 16
        %v402 = vrot.slane %v400, 5
        %v403 = vsel %vm359, %v398, %v402
        %v404 = vshrl.u32 %v343, 16
        %v406 = vrot.slane %v404, 4
        %v407 = vor.u32 %v406, %v402
        %v408 = vrot.slane %v407, 4
        %v410 = vshll.u32 %v344, 16
        %v412 = vrot.slane %v410, 5
        %v413 = vsel %vm359, %v408, %v412
        %v414 = vshrl.u32 %v344, 16
        %v416 = vrot.slane %v414, 4
        %v417 = vor.u32 %v416, %v412
        %v418 = vrot.slane %v417, 4
        %v420 = vshll.u32 %v345, 16
        %v422 = vrot.slane %v420, 5
        %v423 = vsel %vm359, %v418, %v422
        %v424 = vshrl.u32 %v345, 16
        %v426 = vrot.slane %v424, 4
        %v427 = vor.u32 %v426, %v422
        %v428 = vrot.slane %v427, 4
        %v430 = vshll.u32 %v346, 16
        %v432 = vrot.slane %v430, 5
        %v433 = vsel %vm359, %v428, %v432
        %v434 = vshrl.u32 %v346, 16
        %v436 = vrot.slane %v434, 4
        %v437 = vor.u32 %v436, %v432
        %v438 = vrot.slane %v437, 4
        %v440 = vshll.u32 %v347, 16
        %v442 = vrot.slane %v440, 5
        %v443 = vsel %vm359, %v438, %v442
        %v444 = vshrl.u32 %v347, 16
        %v446 = vrot.slane %v444, 4
        %v447 = vor.u32 %v446, %v442
        %v448 = vrot.slane %v447, 4
        %v450 = vshll.u32 %v348, 16
        %v452 = vrot.slane %v450, 5
        %v453 = vsel %vm359, %v448, %v452
        %v454 = vshrl.u32 %v348, 16
        %v456 = vrot.slane %v454, 4
        %v457 = vor.u32 %v456, %v452
        %v458 = vrot.slane %v457, 4
        %v460 = vshll.u32 %v349, 16
        %v462 = vrot.slane %v460, 5
        %v463 = vsel %vm359, %v458, %v462
        %v464 = vshrl.u32 %v349, 16
        %v466 = vrot.slane %v464, 4
        %v467 = vor.u32 %v466, %v462
        %v468 = vrot.slane %v467, 4
        %v470 = vshll.u32 %v350, 16
        %v472 = vrot.slane %v470, 5
        %v473 = vsel %vm359, %v468, %v472
        %v474 = vshrl.u32 %v350, 16
        %v476 = vrot.slane %v474, 4
        %v477 = vor.u32 %v476, %v472
        %v478 = vrot.slane %v477, 4
        %v480 = vshll.u32 %v351, 16
        %v482 = vrot.slane %v480, 5
        %v483 = vsel %vm359, %v478, %v482
        %v484 = vshrl.u32 %v351, 16
        %v486 = vrot.slane %v484, 4
        %v487 = vor.u32 %v486, %v482
        %v488 = vrot.slane %v487, 4
        %v490 = vshll.u32 %v352, 16
        %v492 = vrot.slane %v490, 5
        %v493 = vsel %vm359, %v488, %v492
        %v494 = vshrl.u32 %v352, 16
        %v496 = vrot.slane %v494, 4
        %v497 = vor.u32 %v496, %v492
        %v498 = vrot.slane %v497, 4
        %v500 = vshll.u32 %v353, 16
        %v502 = vrot.slane %v500, 5
        %v503 = vsel %vm359, %v498, %v502
        %v504 = vshrl.u32 %v353, 16
        %v506 = vrot.slane %v504, 4
        %v507 = vor.u32 %v506, %v502
        %v508 = vrot.slane %v507, 4
        %v510 = vshll.u32 %v354, 16
        %v512 = vrot.slane %v510, 5
        %v513 = vsel %vm359, %v508, %v512
        %v514 = vshrl.u32 %v354, 16
        %v516 = vrot.slane %v514, 4
        %v517 = vor.u32 %v516, %v512
        %v518 = vrot.slane %v517, 4
        %vm535 = vcmask 519168
        %536 = vst.msk [vmem:[#allocation2] sm:$0xf] %vm535, %v373
        %537 = vst.msk [vmem:[#allocation2 + $0x4] sm:$0xf] %vm535, %v383
        %538 = vst.msk [vmem:[#allocation2 + $0x8] sm:$0xf] %vm535, %v393
        %539 = vst.msk [vmem:[#allocation2 + $0xc] sm:$0xf] %vm535, %v403
        %540 = vst.msk [vmem:[#allocation2 + $0x10] sm:$0xf] %vm535, %v413
        %541 = vst.msk [vmem:[#allocation2 + $0x14] sm:$0xf] %vm535, %v423
        %542 = vst.msk [vmem:[#allocation2 + $0x18] sm:$0xf] %vm535, %v433
        %543 = vst.msk [vmem:[#allocation2 + $0x1c] sm:$0xf] %vm535, %v443
        %544 = vst.msk [vmem:[#allocation2 + $0x20] sm:$0xf] %vm535, %v453
        %545 = vst.msk [vmem:[#allocation2 + $0x24] sm:$0xf] %vm535, %v463
        %546 = vst.msk [vmem:[#allocation2 + $0x28] sm:$0xf] %vm535, %v473
        %547 = vst.msk [vmem:[#allocation2 + $0x2c] sm:$0xf] %vm535, %v483
        %548 = vst.msk [vmem:[#allocation2 + $0x30] sm:$0xf] %vm535, %v493
        %549 = vst.msk [vmem:[#allocation2 + $0x34] sm:$0xf] %vm535, %v503
        %550 = vst.msk [vmem:[#allocation2 + $0x38] sm:$0xf] %vm535, %v513
        %vm551 = vcmask 519168
        %vm552 = vmand %vm551, %vm357
        %v553 = vld [vmem:[#allocation2 + $0x3c] sm:$0xf]
        %v554 = vsel %vm552, %v518, %v553
        %555 = vst [vmem:[#allocation2 + $0x3c] sm:$0xf] %v554
        %v557 = vshrl.u32 %v355, 16
        %v559 = vrot.slane %v557, 4
        %v560 = vshll.u32 %v355, 16
        %v562 = vrot.slane %v560, 5
        %v563 = vor.u32 %v559, %v562
        %v564 = vrot.slane %v563, 4
        %v566 = vshll.u32 %v356, 16
        %v568 = vrot.slane %v566, 5
        %v569 = vsel %vm359, %v564, %v568
        %v570 = vshrl.u32 %v356, 16
        %v572 = vrot.slane %v570, 4
        %v573 = vor.u32 %v572, %v568
        %v574 = vrot.slane %v573, 4
        %577 = vst.msk [vmem:[#allocation2 + $0x40] sm:$0xf] %vm535, %v569
        %v578 = vld [vmem:[#allocation2 + $0x44] sm:$0xf]
        %v579 = vsel %vm552, %v574, %v578
        %580 = vst [vmem:[#allocation2 + $0x44] sm:$0xf] %v579
        %v581 = vld [vmem:[#allocation8] sm:$0xf]
        %v582 = vld [vmem:[#allocation8 + $0x4] sm:$0xf]
        %v583 = vld [vmem:[#allocation8 + $0x8] sm:$0xf]
        %v584 = vld [vmem:[#allocation8 + $0xc] sm:$0xf]
        %v585 = vld [vmem:[#allocation8 + $0x10] sm:$0xf]
        %v586 = vld [vmem:[#allocation8 + $0x14] sm:$0xf]
        %v587 = vld [vmem:[#allocation8 + $0x18] sm:$0xf]
        %v588 = vld [vmem:[#allocation8 + $0x1c] sm:$0xf]
        %v589 = vld [vmem:[#allocation2] sm:$0xf]
        %v590 = vld [vmem:[#allocation2 + $0x4] sm:$0xf]
        %v591 = vld [vmem:[#allocation2 + $0x8] sm:$0xf]
        %v592 = vld [vmem:[#allocation2 + $0xc] sm:$0xf]
        %v593 = vld [vmem:[#allocation2 + $0x10] sm:$0xf]
        %v594 = vld [vmem:[#allocation2 + $0x14] sm:$0xf]
        %v595 = vld [vmem:[#allocation2 + $0x18] sm:$0xf]
        %v596 = vld [vmem:[#allocation2 + $0x1c] sm:$0xf]
        %v597 = vld [vmem:[#allocation2 + $0x20] sm:$0xf]
        %v598 = vld [vmem:[#allocation2 + $0x24] sm:$0xf]
        %v599 = vld [vmem:[#allocation2 + $0x28] sm:$0xf]
        %v600 = vld [vmem:[#allocation2 + $0x2c] sm:$0xf]
        %v601 = vld [vmem:[#allocation2 + $0x30] sm:$0xf]
        %v602 = vld [vmem:[#allocation2 + $0x34] sm:$0xf]
        %v603 = vld [vmem:[#allocation2 + $0x38] sm:$0xf]
        %v604 = vld [vmem:[#allocation2 + $0x3c] sm:$0xf]
        %s605 = scalar_lea.vmem [#allocation8], 32
        %v606 = vld [vmem:[%s605] sm:$0xf]
        %v607 = vld [vmem:[%s605 + $0x4] sm:$0xf]
        %v608 = vld [vmem:[%s605 + $0x8] sm:$0xf]
        %v609 = vld [vmem:[%s605 + $0xc] sm:$0xf]
        %v610 = vld [vmem:[%s605 + $0x10] sm:$0xf]
        %v611 = vld [vmem:[%s605 + $0x14] sm:$0xf]
        %v612 = vld [vmem:[%s605 + $0x18] sm:$0xf]
        %v613 = vld [vmem:[%s605 + $0x1c] sm:$0xf]
        %v630 = vunpack.c.l.b16 %v589
        %v631 = vunpack.c.l.b16 %v590
        %v632 = vunpack.c.l.b16 %v591
        %v633 = vunpack.c.l.b16 %v592
        %v634 = vunpack.c.l.b16 %v593
        %v635 = vunpack.c.l.b16 %v594
        %v636 = vunpack.c.l.b16 %v595
        %v637 = vunpack.c.l.b16 %v596
        %v638 = vunpack.c.l.b16 %v597
        %v639 = vunpack.c.l.b16 %v598
        %v640 = vunpack.c.l.b16 %v599
        %v641 = vunpack.c.l.b16 %v600
        %v642 = vunpack.c.l.b16 %v601
        %v643 = vunpack.c.l.b16 %v602
        %v644 = vunpack.c.l.b16 %v603
        %v645 = vunpack.c.l.b16 %v604
        %v646 = vpack.c.b16 %v631, %v630
        %v647 = vpack.c.b16 %v633, %v632
        %v648 = vpack.c.b16 %v635, %v634
        %v649 = vpack.c.b16 %v637, %v636
        %v650 = vpack.c.b16 %v639, %v638
        %v651 = vpack.c.b16 %v641, %v640
        %v652 = vpack.c.b16 %v643, %v642
        %v653 = vpack.c.b16 %v645, %v644
        %v662 = vunpack.c.l.b16 %v606
        %v663 = vunpack.c.l.b16 %v607
        %v664 = vunpack.c.l.b16 %v608
        %v665 = vunpack.c.l.b16 %v609
        %v666 = vunpack.c.l.b16 %v610
        %v667 = vunpack.c.l.b16 %v611
        %v668 = vunpack.c.l.b16 %v612
        %v669 = vunpack.c.l.b16 %v613
        %v670 = vpack.c.b16 %v663, %v662
        %v671 = vpack.c.b16 %v665, %v664
        %v672 = vpack.c.b16 %v667, %v666
        %v673 = vpack.c.b16 %v669, %v668
        %vm678 = vcmask 523264
        %v680 = vsel %vm678, %v646, 0
        %v683 = vsel %vm678, %v647, 0
        %v686 = vsel %vm678, %v648, 0
        %v689 = vsel %vm678, %v649, 0
        %v692 = vsel %vm678, %v650, 0
        %v695 = vsel %vm678, %v651, 0
        %v698 = vsel %vm678, %v652, 0
        %v701 = vsel %vm678, %v653, 0
        %703 = vmatpush.bf16.msra.mxu0 0
        %704 = vmatpush.bf16.msra.mxu0 0
        %705 = vmatpush.bf16.msra.mxu0 0
        %706 = vmatpush.bf16.msra.mxu0 0
        %707 = vmatpush.bf16.msra.mxu0 %v673
        %708 = vmatpush.bf16.msra.mxu0 %v672
        %709 = vmatpush.bf16.msra.mxu0 %v671
        %710 = vmatpush.bf16.msra.mxu0 %v670
        %711 = vmatmul.bf16.gmra.mxu0 %v680
        %v712 = vpop.f32.mrf.mxu0
        %v713 = vadd.f32 0.0, %v712
        %v714 = vpop.f32.mrf.mxu0
        %715 = vmatmul.bf16.gmra.mxu0 %v683
        %v716 = vpop.f32.mrf.mxu0
        %v717 = vadd.f32 0.0, %v716
        %v718 = vpop.f32.mrf.mxu0
        %719 = vmatmul.bf16.gmra.mxu0 %v686
        %v720 = vpop.f32.mrf.mxu0
        %v721 = vadd.f32 0.0, %v720
        %v722 = vpop.f32.mrf.mxu0
        %723 = vmatmul.bf16.gmra.mxu0 %v689
        %v724 = vpop.f32.mrf.mxu0
        %v725 = vadd.f32 0.0, %v724
        %v726 = vpop.f32.mrf.mxu0
        %727 = vmatmul.bf16.gmra.mxu0 %v692
        %v728 = vpop.f32.mrf.mxu0
        %v729 = vadd.f32 0.0, %v728
        %v730 = vpop.f32.mrf.mxu0
        %731 = vmatmul.bf16.gmra.mxu0 %v695
        %v732 = vpop.f32.mrf.mxu0
        %v733 = vadd.f32 0.0, %v732
        %v734 = vpop.f32.mrf.mxu0
        %735 = vmatmul.bf16.gmra.mxu0 %v698
        %v736 = vpop.f32.mrf.mxu0
        %v737 = vadd.f32 0.0, %v736
        %v738 = vpop.f32.mrf.mxu0
        %739 = vmatmul.bf16.gmra.mxu0 %v701
        %v740 = vpop.f32.mrf.mxu0
        %v741 = vadd.f32 0.0, %v740
        %v742 = vpop.f32.mrf.mxu0
        %743 = vdwg.mxu0
        %v760 = vunpack.c.l.b16 %v339
        %v761 = vunpack.c.l.b16 %v340
        %v762 = vunpack.c.l.b16 %v341
        %v763 = vunpack.c.l.b16 %v342
        %v764 = vunpack.c.l.b16 %v343
        %v765 = vunpack.c.l.b16 %v344
        %v766 = vunpack.c.l.b16 %v345
        %v767 = vunpack.c.l.b16 %v346
        %v768 = vunpack.c.l.b16 %v347
        %v769 = vunpack.c.l.b16 %v348
        %v770 = vunpack.c.l.b16 %v349
        %v771 = vunpack.c.l.b16 %v350
        %v772 = vunpack.c.l.b16 %v351
        %v773 = vunpack.c.l.b16 %v352
        %v774 = vunpack.c.l.b16 %v353
        %v775 = vunpack.c.l.b16 %v354
        %v776 = vpack.c.b16 %v761, %v760
        %v777 = vpack.c.b16 %v763, %v762
        %v778 = vpack.c.b16 %v765, %v764
        %v779 = vpack.c.b16 %v767, %v766
        %v780 = vpack.c.b16 %v769, %v768
        %v781 = vpack.c.b16 %v771, %v770
        %v782 = vpack.c.b16 %v773, %v772
        %v783 = vpack.c.b16 %v775, %v774
        %v792 = vunpack.c.l.b16 %v581
        %v793 = vunpack.c.l.b16 %v582
        %v794 = vunpack.c.l.b16 %v583
        %v795 = vunpack.c.l.b16 %v584
        %v796 = vunpack.c.l.b16 %v585
        %v797 = vunpack.c.l.b16 %v586
        %v798 = vunpack.c.l.b16 %v587
        %v799 = vunpack.c.l.b16 %v588
        %v800 = vpack.c.b16 %v793, %v792
        %v801 = vpack.c.b16 %v795, %v794
        %v802 = vpack.c.b16 %v797, %v796
        %v803 = vpack.c.b16 %v799, %v798
        %v809 = vsel %vm678, %v776, 0
        %v812 = vsel %vm678, %v777, 0
        %v815 = vsel %vm678, %v778, 0
        %v818 = vsel %vm678, %v779, 0
        %v821 = vsel %vm678, %v780, 0
        %v824 = vsel %vm678, %v781, 0
        %v827 = vsel %vm678, %v782, 0
        %v830 = vsel %vm678, %v783, 0
        %832 = vmatpush.bf16.msra.mxu0 0
        %833 = vmatpush.bf16.msra.mxu0 0
        %834 = vmatpush.bf16.msra.mxu0 0
        %835 = vmatpush.bf16.msra.mxu0 0
        %836 = vmatpush.bf16.msra.mxu0 %v803
        %837 = vmatpush.bf16.msra.mxu0 %v802
        %838 = vmatpush.bf16.msra.mxu0 %v801
        %839 = vmatpush.bf16.msra.mxu0 %v800
        %840 = vmatmul.bf16.gmra.mxu0 %v809
        %v841 = vpop.f32.mrf.mxu0
        %v842 = vadd.f32 %v713, %v841
        %v843 = vpop.f32.mrf.mxu0
        %844 = vmatmul.bf16.gmra.mxu0 %v812
        %v845 = vpop.f32.mrf.mxu0
        %v846 = vadd.f32 %v717, %v845
        %v847 = vpop.f32.mrf.mxu0
        %848 = vmatmul.bf16.gmra.mxu0 %v815
        %v849 = vpop.f32.mrf.mxu0
        %v850 = vadd.f32 %v721, %v849
        %v851 = vpop.f32.mrf.mxu0
        %852 = vmatmul.bf16.gmra.mxu0 %v818
        %v853 = vpop.f32.mrf.mxu0
        %v854 = vadd.f32 %v725, %v853
        %v855 = vpop.f32.mrf.mxu0
        %856 = vmatmul.bf16.gmra.mxu0 %v821
        %v857 = vpop.f32.mrf.mxu0
        %v858 = vadd.f32 %v729, %v857
        %v859 = vpop.f32.mrf.mxu0
        %860 = vmatmul.bf16.gmra.mxu0 %v824
        %v861 = vpop.f32.mrf.mxu0
        %v862 = vadd.f32 %v733, %v861
        %v863 = vpop.f32.mrf.mxu0
        %864 = vmatmul.bf16.gmra.mxu0 %v827
        %v865 = vpop.f32.mrf.mxu0
        %v866 = vadd.f32 %v737, %v865
        %v867 = vpop.f32.mrf.mxu0
        %868 = vmatmul.bf16.gmra.mxu0 %v830
        %v869 = vpop.f32.mrf.mxu0
        %v870 = vadd.f32 %v741, %v869
        %v871 = vpop.f32.mrf.mxu0
        %872 = vdwg.mxu0
        %s873 = scalar_lea.vmem [#allocation8], 64
        %v874 = vld [vmem:[%s873] sm:$0xf]
        %v875 = vld [vmem:[%s873 + $0x4] sm:$0xf]
        %v876 = vld [vmem:[%s873 + $0x8] sm:$0xf]
        %v877 = vld [vmem:[%s873 + $0xc] sm:$0xf]
        %v878 = vld [vmem:[%s873 + $0x10] sm:$0xf]
        %v879 = vld [vmem:[%s873 + $0x14] sm:$0xf]
        %v880 = vld [vmem:[%s873 + $0x18] sm:$0xf]
        %v881 = vld [vmem:[%s873 + $0x1c] sm:$0xf]
        %s882 = scalar_lea.vmem [#allocation8], 96
        %v883 = vld [vmem:[%s882] sm:$0xf]
        %v884 = vld [vmem:[%s882 + $0x4] sm:$0xf]
        %v885 = vld [vmem:[%s882 + $0x8] sm:$0xf]
        %v886 = vld [vmem:[%s882 + $0xc] sm:$0xf]
        %v887 = vld [vmem:[%s882 + $0x10] sm:$0xf]
        %v888 = vld [vmem:[%s882 + $0x14] sm:$0xf]
        %v889 = vld [vmem:[%s882 + $0x18] sm:$0xf]
        %v890 = vld [vmem:[%s882 + $0x1c] sm:$0xf]
        %v899 = vunpack.c.l.b16 %v883
        %v900 = vunpack.c.l.b16 %v884
        %v901 = vunpack.c.l.b16 %v885
        %v902 = vunpack.c.l.b16 %v886
        %v903 = vunpack.c.l.b16 %v887
        %v904 = vunpack.c.l.b16 %v888
        %v905 = vunpack.c.l.b16 %v889
        %v906 = vunpack.c.l.b16 %v890
        %v907 = vpack.c.b16 %v900, %v899
        %v908 = vpack.c.b16 %v902, %v901
        %v909 = vpack.c.b16 %v904, %v903
        %v910 = vpack.c.b16 %v906, %v905
        %915 = vmatpush.bf16.msra.mxu0 0
        %916 = vmatpush.bf16.msra.mxu0 0
        %917 = vmatpush.bf16.msra.mxu0 0
        %918 = vmatpush.bf16.msra.mxu0 0
        %919 = vmatpush.bf16.msra.mxu0 %v910
        %920 = vmatpush.bf16.msra.mxu0 %v909
        %921 = vmatpush.bf16.msra.mxu0 %v908
        %922 = vmatpush.bf16.msra.mxu0 %v907
        %923 = vmatmul.bf16.gmra.mxu0 %v683
        %v924 = vpop.f32.mrf.mxu0
        %v925 = vadd.f32 0.0, %v924
        %v926 = vpop.f32.mrf.mxu0
        %927 = vmatmul.bf16.gmra.mxu0 %v686
        %v928 = vpop.f32.mrf.mxu0
        %v929 = vadd.f32 0.0, %v928
        %v930 = vpop.f32.mrf.mxu0
        %931 = vmatmul.bf16.gmra.mxu0 %v689
        %v932 = vpop.f32.mrf.mxu0
        %v933 = vadd.f32 0.0, %v932
        %v934 = vpop.f32.mrf.mxu0
        %935 = vmatmul.bf16.gmra.mxu0 %v692
        %v936 = vpop.f32.mrf.mxu0
        %v937 = vadd.f32 0.0, %v936
        %v938 = vpop.f32.mrf.mxu0
        %939 = vmatmul.bf16.gmra.mxu0 %v695
        %v940 = vpop.f32.mrf.mxu0
        %v941 = vadd.f32 0.0, %v940
        %v942 = vpop.f32.mrf.mxu0
        %943 = vmatmul.bf16.gmra.mxu0 %v698
        %v944 = vpop.f32.mrf.mxu0
        %v945 = vadd.f32 0.0, %v944
        %v946 = vpop.f32.mrf.mxu0
        %947 = vmatmul.bf16.gmra.mxu0 %v701
        %v948 = vpop.f32.mrf.mxu0
        %v949 = vadd.f32 0.0, %v948
        %v950 = vpop.f32.mrf.mxu0
        %951 = vdwg.mxu0
        %v960 = vunpack.c.l.b16 %v874
        %v961 = vunpack.c.l.b16 %v875
        %v962 = vunpack.c.l.b16 %v876
        %v963 = vunpack.c.l.b16 %v877
        %v964 = vunpack.c.l.b16 %v878
        %v965 = vunpack.c.l.b16 %v879
        %v966 = vunpack.c.l.b16 %v880
        %v967 = vunpack.c.l.b16 %v881
        %v968 = vpack.c.b16 %v961, %v960
        %v969 = vpack.c.b16 %v963, %v962
        %v970 = vpack.c.b16 %v965, %v964
        %v971 = vpack.c.b16 %v967, %v966
        %976 = vmatpush.bf16.msra.mxu0 0
        %977 = vmatpush.bf16.msra.mxu0 0
        %978 = vmatpush.bf16.msra.mxu0 0
        %979 = vmatpush.bf16.msra.mxu0 0
        %980 = vmatpush.bf16.msra.mxu0 %v971
        %981 = vmatpush.bf16.msra.mxu0 %v970
        %982 = vmatpush.bf16.msra.mxu0 %v969
        %983 = vmatpush.bf16.msra.mxu0 %v968
        %984 = vmatmul.bf16.gmra.mxu0 %v812
        %v985 = vpop.f32.mrf.mxu0
        %v986 = vadd.f32 %v925, %v985
        %v987 = vpop.f32.mrf.mxu0
        %988 = vmatmul.bf16.gmra.mxu0 %v815
        %v989 = vpop.f32.mrf.mxu0
        %v990 = vadd.f32 %v929, %v989
        %v991 = vpop.f32.mrf.mxu0
        %992 = vmatmul.bf16.gmra.mxu0 %v818
        %v993 = vpop.f32.mrf.mxu0
        %v994 = vadd.f32 %v933, %v993
        %v995 = vpop.f32.mrf.mxu0
        %996 = vmatmul.bf16.gmra.mxu0 %v821
        %v997 = vpop.f32.mrf.mxu0
        %v998 = vadd.f32 %v937, %v997
        %v999 = vpop.f32.mrf.mxu0
        %1000 = vmatmul.bf16.gmra.mxu0 %v824
        %v1001 = vpop.f32.mrf.mxu0
        %v1002 = vadd.f32 %v941, %v1001
        %v1003 = vpop.f32.mrf.mxu0
        %1004 = vmatmul.bf16.gmra.mxu0 %v827
        %v1005 = vpop.f32.mrf.mxu0
        %v1006 = vadd.f32 %v945, %v1005
        %v1007 = vpop.f32.mrf.mxu0
        %1008 = vmatmul.bf16.gmra.mxu0 %v830
        %v1009 = vpop.f32.mrf.mxu0
        %v1010 = vadd.f32 %v949, %v1009
        %v1011 = vpop.f32.mrf.mxu0
        %1012 = vdwg.mxu0
        %v1013 = vadd.f32 %v842, %v986
        %v1014 = vadd.f32 %v846, %v990
        %v1015 = vadd.f32 %v850, %v994
        %v1016 = vadd.f32 %v854, %v998
        %v1017 = vadd.f32 %v858, %v1002
        %v1018 = vadd.f32 %v862, %v1006
        %v1019 = vadd.f32 %v866, %v1010
        %v1020 = vld [vmem:[#allocation9] sm:$0x1]
        %v1021 = vperm.slane %v1020, 0
        %v1022 = vadd.f32 %v1013, %v1021
        %v1023 = vadd.f32 %v1014, %v1021
        %v1024 = vadd.f32 %v1015, %v1021
        %v1025 = vadd.f32 %v1016, %v1021
        %v1026 = vadd.f32 %v1017, %v1021
        %v1027 = vadd.f32 %v1018, %v1021
        %v1028 = vadd.f32 %v1019, %v1021
        %1029 = vadd.xlane.f32.xlu0 %v1022
        %v1030 = vpop.xlane.xlu0 %1029
        %1031 = vadd.xlane.f32.xlu0 %v1023
        %v1032 = vpop.xlane.xlu0 %1031
        %1033 = vadd.xlane.f32.xlu0 %v1024
        %v1034 = vpop.xlane.xlu0 %1033
        %1035 = vadd.xlane.f32.xlu0 %v1025
        %v1036 = vpop.xlane.xlu0 %1035
        %1037 = vadd.xlane.f32.xlu0 %v1026
        %v1038 = vpop.xlane.xlu0 %1037
        %1039 = vadd.xlane.f32.xlu0 %v1027
        %v1040 = vpop.xlane.xlu0 %1039
        %1041 = vadd.xlane.f32.xlu0 %v1028
        %v1042 = vpop.xlane.xlu0 %1041
        %v1043 = vmul.f32 %v1030, 0.03125
        %v1044 = vmul.f32 %v1032, 0.03125
        %v1045 = vmul.f32 %v1034, 0.03125
        %v1046 = vmul.f32 %v1036, 0.03125
        %v1047 = vmul.f32 %v1038, 0.03125
        %v1048 = vmul.f32 %v1040, 0.03125
        %v1049 = vmul.f32 %v1042, 0.03125
        %v1050 = vsub.f32 %v1022, %v1043
        %v1051 = vsub.f32 %v1023, %v1044
        %v1052 = vsub.f32 %v1024, %v1045
        %v1053 = vsub.f32 %v1025, %v1046
        %v1054 = vsub.f32 %v1026, %v1047
        %v1055 = vsub.f32 %v1027, %v1048
        %v1056 = vsub.f32 %v1028, %v1049
        %v1057 = vmul.f32 %v1050, %v1050
        %v1058 = vmul.f32 %v1051, %v1051
        %v1059 = vmul.f32 %v1052, %v1052
        %v1060 = vmul.f32 %v1053, %v1053
        %v1061 = vmul.f32 %v1054, %v1054
        %v1062 = vmul.f32 %v1055, %v1055
        %v1063 = vmul.f32 %v1056, %v1056
        %1064 = vadd.xlane.f32.xlu0 %v1057
        %v1065 = vpop.xlane.xlu0 %1064
        %1066 = vadd.xlane.f32.xlu0 %v1058
        %v1067 = vpop.xlane.xlu0 %1066
        %1068 = vadd.xlane.f32.xlu0 %v1059
        %v1069 = vpop.xlane.xlu0 %1068
        %1070 = vadd.xlane.f32.xlu0 %v1060
        %v1071 = vpop.xlane.xlu0 %1070
        %1072 = vadd.xlane.f32.xlu0 %v1061
        %v1073 = vpop.xlane.xlu0 %1072
        %1074 = vadd.xlane.f32.xlu0 %v1062
        %v1075 = vpop.xlane.xlu0 %1074
        %1076 = vadd.xlane.f32.xlu0 %v1063
        %v1077 = vpop.xlane.xlu0 %1076
        %v1078 = vmul.f32 %v1043, 96.0
        %v1079 = vmul.f32 %v1044, 96.0
        %v1080 = vmul.f32 %v1045, 96.0
        %v1081 = vmul.f32 %v1046, 96.0
        %v1082 = vmul.f32 %v1047, 96.0
        %v1083 = vmul.f32 %v1048, 96.0
        %v1084 = vmul.f32 %v1049, 96.0
        %v1085 = vmul.f32 %v1078, %v1043
        %v1086 = vmul.f32 %v1079, %v1044
        %v1087 = vmul.f32 %v1080, %v1045
        %v1088 = vmul.f32 %v1081, %v1046
        %v1089 = vmul.f32 %v1082, %v1047
        %v1090 = vmul.f32 %v1083, %v1048
        %v1091 = vmul.f32 %v1084, %v1049
        %v1092 = vsub.f32 %v1065, %v1085
        %v1093 = vsub.f32 %v1067, %v1086
        %v1094 = vsub.f32 %v1069, %v1087
        %v1095 = vsub.f32 %v1071, %v1088
        %v1096 = vsub.f32 %v1073, %v1089
        %v1097 = vsub.f32 %v1075, %v1090
        %v1098 = vsub.f32 %v1077, %v1091
        %v1099 = vmul.f32 %v1092, 0.03125
        %v1100 = vmul.f32 %v1093, 0.03125
        %v1101 = vmul.f32 %v1094, 0.03125
        %v1102 = vmul.f32 %v1095, 0.03125
        %v1103 = vmul.f32 %v1096, 0.03125
        %v1104 = vmul.f32 %v1097, 0.03125
        %v1105 = vmul.f32 %v1098, 0.03125
        %v1106 = vadd.f32 %v1099, 1e-05
        %v1107 = vadd.f32 %v1100, 1e-05
        %v1108 = vadd.f32 %v1101, 1e-05
        %v1109 = vadd.f32 %v1102, 1e-05
        %v1110 = vadd.f32 %v1103, 1e-05
        %v1111 = vadd.f32 %v1104, 1e-05
        %v1112 = vadd.f32 %v1105, 1e-05
        %v1113 = vrsqrt.pop %v1106
        %v1114 = vmul.f32 %v1113, %v1106
        %v1115 = vmul.f32 %v1114, %v1113
        %v1116 = vmul.f32 0.5, %v1115
        %v1117 = vsub.f32 1.5, %v1116
        %v1118 = vmul.f32 %v1113, %v1117
        %vm1119 = vweird.f32 %v1106
        %vm1120 = vweird.f32 %v1113
        %vm1121 = vmor %vm1119, %vm1120
        %v1122 = vsel %vm1121, %v1113, %v1118
        %v1123 = vrsqrt.pop %v1107
        %v1124 = vmul.f32 %v1123, %v1107
        %v1125 = vmul.f32 %v1124, %v1123
        %v1126 = vmul.f32 0.5, %v1125
        %v1127 = vsub.f32 1.5, %v1126
        %v1128 = vmul.f32 %v1123, %v1127
        %vm1129 = vweird.f32 %v1107
        %vm1130 = vweird.f32 %v1123
        %vm1131 = vmor %vm1129, %vm1130
        %v1132 = vsel %vm1131, %v1123, %v1128
        %v1133 = vrsqrt.pop %v1108
        %v1134 = vmul.f32 %v1133, %v1108
        %v1135 = vmul.f32 %v1134, %v1133
        %v1136 = vmul.f32 0.5, %v1135
        %v1137 = vsub.f32 1.5, %v1136
        %v1138 = vmul.f32 %v1133, %v1137
        %vm1139 = vweird.f32 %v1108
        %vm1140 = vweird.f32 %v1133
        %vm1141 = vmor %vm1139, %vm1140
        %v1142 = vsel %vm1141, %v1133, %v1138
        %v1143 = vrsqrt.pop %v1109
        %v1144 = vmul.f32 %v1143, %v1109
        %v1145 = vmul.f32 %v1144, %v1143
        %v1146 = vmul.f32 0.5, %v1145
        %v1147 = vsub.f32 1.5, %v1146
        %v1148 = vmul.f32 %v1143, %v1147
        %vm1149 = vweird.f32 %v1109
        %vm1150 = vweird.f32 %v1143
        %vm1151 = vmor %vm1149, %vm1150
        %v1152 = vsel %vm1151, %v1143, %v1148
        %v1153 = vrsqrt.pop %v1110
        %v1154 = vmul.f32 %v1153, %v1110
        %v1155 = vmul.f32 %v1154, %v1153
        %v1156 = vmul.f32 0.5, %v1155
        %v1157 = vsub.f32 1.5, %v1156
        %v1158 = vmul.f32 %v1153, %v1157
        %vm1159 = vweird.f32 %v1110
        %vm1160 = vweird.f32 %v1153
        %vm1161 = vmor %vm1159, %vm1160
        %v1162 = vsel %vm1161, %v1153, %v1158
        %v1163 = vrsqrt.pop %v1111
        %v1164 = vmul.f32 %v1163, %v1111
        %v1165 = vmul.f32 %v1164, %v1163
        %v1166 = vmul.f32 0.5, %v1165
        %v1167 = vsub.f32 1.5, %v1166
        %v1168 = vmul.f32 %v1163, %v1167
        %vm1169 = vweird.f32 %v1111
        %vm1170 = vweird.f32 %v1163
        %vm1171 = vmor %vm1169, %vm1170
        %v1172 = vsel %vm1171, %v1163, %v1168
        %v1173 = vrsqrt.pop %v1112
        %v1174 = vmul.f32 %v1173, %v1112
        %v1175 = vmul.f32 %v1174, %v1173
        %v1176 = vmul.f32 0.5, %v1175
        %v1177 = vsub.f32 1.5, %v1176
        %v1178 = vmul.f32 %v1173, %v1177
        %vm1179 = vweird.f32 %v1112
        %vm1180 = vweird.f32 %v1173
        %vm1181 = vmor %vm1179, %vm1180
        %v1182 = vsel %vm1181, %v1173, %v1178
        %v1183 = vld [vmem:[#allocation9 + $0x1] sm:$0x1]
        %v1184 = vperm.slane %v1183, 0
        %v1185 = vmul.f32 %v1122, %v1184
        %v1186 = vmul.f32 %v1132, %v1184
        %v1187 = vmul.f32 %v1142, %v1184
        %v1188 = vmul.f32 %v1152, %v1184
        %v1189 = vmul.f32 %v1162, %v1184
        %v1190 = vmul.f32 %v1172, %v1184
        %v1191 = vmul.f32 %v1182, %v1184
        %v1192 = vmul.f32 %v1050, %v1185
        %v1193 = vmul.f32 %v1051, %v1186
        %v1194 = vmul.f32 %v1052, %v1187
        %v1195 = vmul.f32 %v1053, %v1188
        %v1196 = vmul.f32 %v1054, %v1189
        %v1197 = vmul.f32 %v1055, %v1190
        %v1198 = vmul.f32 %v1056, %v1191
        %v1199 = vld [vmem:[#allocation9 + $0x2] sm:$0x1]
        %v1200 = vperm.slane %v1199, 0
        %v1201 = vadd.f32 %v1192, %v1200
        %v1202 = vadd.f32 %v1193, %v1200
        %v1203 = vadd.f32 %v1194, %v1200
        %v1204 = vadd.f32 %v1195, %v1200
        %v1205 = vadd.f32 %v1196, %v1200
        %v1206 = vadd.f32 %v1197, %v1200
        %v1207 = vadd.f32 %v1198, %v1200
        %1208 = vst [vmem:[%s328] sm:$0xff] %v1201
        %1209 = vst [vmem:[%s328 + $0x8] sm:$0xff] %v1202
        %1210 = vst [vmem:[%s328 + $0x10] sm:$0xff] %v1203
        %1211 = vst [vmem:[%s328 + $0x18] sm:$0xff] %v1204
        %1212 = vst [vmem:[%s328 + $0x20] sm:$0xff] %v1205
        %1213 = vst [vmem:[%s328 + $0x28] sm:$0xff] %v1206
        %1214 = vst [vmem:[%s328 + $0x30] sm:$0xff] %v1207
        %v1215 = vld [vmem:[%s873] sm:$0xf]
        %v1216 = vld [vmem:[%s873 + $0x4] sm:$0xf]
        %v1217 = vld [vmem:[%s873 + $0x8] sm:$0xf]
        %v1218 = vld [vmem:[%s873 + $0xc] sm:$0xf]
        %v1219 = vld [vmem:[%s873 + $0x10] sm:$0xf]
        %v1220 = vld [vmem:[%s873 + $0x14] sm:$0xf]
        %v1221 = vld [vmem:[%s873 + $0x18] sm:$0xf]
        %v1222 = vld [vmem:[%s873 + $0x1c] sm:$0xf]
        %v1223 = vld [vmem:[#allocation2 + $0x40] sm:$0xf]
        %v1224 = vld [vmem:[#allocation2 + $0x44] sm:$0xf]
        %v1225 = vld [vmem:[%s882] sm:$0xf]
        %v1226 = vld [vmem:[%s882 + $0x4] sm:$0xf]
        %v1227 = vld [vmem:[%s882 + $0x8] sm:$0xf]
        %v1228 = vld [vmem:[%s882 + $0xc] sm:$0xf]
        %v1229 = vld [vmem:[%s882 + $0x10] sm:$0xf]
        %v1230 = vld [vmem:[%s882 + $0x14] sm:$0xf]
        %v1231 = vld [vmem:[%s882 + $0x18] sm:$0xf]
        %v1232 = vld [vmem:[%s882 + $0x1c] sm:$0xf]
        %v1235 = vunpack.c.l.b16 %v1223
        %v1236 = vunpack.c.l.b16 %v1224
        %v1237 = vpack.c.b16 %v1236, %v1235
        %v1246 = vunpack.c.l.b16 %v1225
        %v1247 = vunpack.c.l.b16 %v1226
        %v1248 = vunpack.c.l.b16 %v1227
        %v1249 = vunpack.c.l.b16 %v1228
        %v1250 = vunpack.c.l.b16 %v1229
        %v1251 = vunpack.c.l.b16 %v1230
        %v1252 = vunpack.c.l.b16 %v1231
        %v1253 = vunpack.c.l.b16 %v1232
        %v1254 = vpack.c.b16 %v1247, %v1246
        %v1255 = vpack.c.b16 %v1249, %v1248
        %v1256 = vpack.c.b16 %v1251, %v1250
        %v1257 = vpack.c.b16 %v1253, %v1252
        %v1263 = vsel %vm678, %v1237, 0
        %1265 = vmatpush.bf16.msra.mxu0 0
        %1266 = vmatpush.bf16.msra.mxu0 0
        %1267 = vmatpush.bf16.msra.mxu0 0
        %1268 = vmatpush.bf16.msra.mxu0 0
        %1269 = vmatpush.bf16.msra.mxu0 %v1257
        %1270 = vmatpush.bf16.msra.mxu0 %v1256
        %1271 = vmatpush.bf16.msra.mxu0 %v1255
        %1272 = vmatpush.bf16.msra.mxu0 %v1254
        %1273 = vmatmul.bf16.gmra.mxu0 %v1263
        %v1274 = vpop.f32.mrf.mxu0
        %v1275 = vadd.f32 0.0, %v1274
        %v1276 = vpop.f32.mrf.mxu0
        %1277 = vdwg.mxu0
        %v1280 = vunpack.c.l.b16 %v355
        %v1281 = vunpack.c.l.b16 %v356
        %v1282 = vpack.c.b16 %v1281, %v1280
        %v1291 = vunpack.c.l.b16 %v1215
        %v1292 = vunpack.c.l.b16 %v1216
        %v1293 = vunpack.c.l.b16 %v1217
        %v1294 = vunpack.c.l.b16 %v1218
        %v1295 = vunpack.c.l.b16 %v1219
        %v1296 = vunpack.c.l.b16 %v1220
        %v1297 = vunpack.c.l.b16 %v1221
        %v1298 = vunpack.c.l.b16 %v1222
        %v1299 = vpack.c.b16 %v1292, %v1291
        %v1300 = vpack.c.b16 %v1294, %v1293
        %v1301 = vpack.c.b16 %v1296, %v1295
        %v1302 = vpack.c.b16 %v1298, %v1297
        %v1308 = vsel %vm678, %v1282, 0
        %1310 = vmatpush.bf16.msra.mxu0 0
        %1311 = vmatpush.bf16.msra.mxu0 0
        %1312 = vmatpush.bf16.msra.mxu0 0
        %1313 = vmatpush.bf16.msra.mxu0 0
        %1314 = vmatpush.bf16.msra.mxu0 %v1302
        %1315 = vmatpush.bf16.msra.mxu0 %v1301
        %1316 = vmatpush.bf16.msra.mxu0 %v1300
        %1317 = vmatpush.bf16.msra.mxu0 %v1299
        %1318 = vmatmul.bf16.gmra.mxu0 %v1308
        %v1319 = vpop.f32.mrf.mxu0
        %v1320 = vadd.f32 %v1275, %v1319
        %v1321 = vpop.f32.mrf.mxu0
        %1322 = vdwg.mxu0
        %v1323 = vadd.f32 %v870, %v1320
        %v1324 = vld [vmem:[#allocation9] sm:$0x1]
        %v1325 = vperm.slane %v1324, 0
        %v1326 = vadd.f32 %v1323, %v1325
        %1327 = vadd.xlane.f32.xlu0 %v1326
        %v1328 = vpop.xlane.xlu0 %1327
        %v1329 = vmul.f32 %v1328, 0.03125
        %v1330 = vsub.f32 %v1326, %v1329
        %v1331 = vmul.f32 %v1330, %v1330
        %1332 = vadd.xlane.f32.xlu0 %v1331
        %v1333 = vpop.xlane.xlu0 %1332
        %v1334 = vmul.f32 %v1329, 96.0
        %v1335 = vmul.f32 %v1334, %v1329
        %v1336 = vsub.f32 %v1333, %v1335
        %v1337 = vmul.f32 %v1336, 0.03125
        %v1338 = vadd.f32 %v1337, 1e-05
        %v1339 = vrsqrt.pop %v1338
        %v1340 = vmul.f32 %v1339, %v1338
        %v1341 = vmul.f32 %v1340, %v1339
        %v1342 = vmul.f32 0.5, %v1341
        %v1343 = vsub.f32 1.5, %v1342
        %v1344 = vmul.f32 %v1339, %v1343
        %vm1345 = vweird.f32 %v1338
        %vm1346 = vweird.f32 %v1339
        %vm1347 = vmor %vm1345, %vm1346
        %v1348 = vsel %vm1347, %v1339, %v1344
        %v1349 = vld [vmem:[#allocation9 + $0x1] sm:$0x1]
        %v1350 = vperm.slane %v1349, 0
        %v1351 = vmul.f32 %v1348, %v1350
        %v1352 = vmul.f32 %v1330, %v1351
        %v1353 = vld [vmem:[#allocation9 + $0x2] sm:$0x1]
        %v1354 = vperm.slane %v1353, 0
        %v1355 = vadd.f32 %v1352, %v1354
        %1356 = vst [vmem:[%s328 + $0x38] sm:$0xff] %v1355
        %s1357 = sand.u32 %s149, 1
        %s1358 = scalar_lea.sflag [#allocation5], %s1357
        %s1359 = sand.u32 %s149, 1
        %s1360 = smul.addr %s1359, 64
        %s1361 = scalar_lea.vmem [#allocation11], %s1360
        // Predicated region
        $region53: #{tpu_custom_call.1} parent=35 // pred_check
          %p1362 = pneg %p159
        $region54: #{tpu_custom_call.1} parent=35 // pred_check_branch
          %1364 = sbr.rel (%p1362) target = $region56
        $region55: #{tpu_custom_call.1} parent=35 // pred_region
          %s1365 = smul.u32 8, %s30
          %1367 = vsyncadd %s1358, 0
          %s1368 = smul.addr %s29, 8
          %s1369 = sadd.s32 %s1365, %s1368
          %s1370 = smul.addr %s1369, 8
          %s1371 = scalar_lea.hbm %s4, %s1370
          %s1372 = sshll.u32 %s1361, 4
          %s1373 = int_to_ptr.vmem [resolvable:$true] %s1372
          %s1374 = sshll.u32 %s1371, 4
          %s1375 = int_to_ptr.hbm [resolvable:$true] %s1374
          %1380 = dma.vmem_to_hbm [thread:$0]  %s1373, 1024, %s1375, %s1358, 128, 128, 8
        $region56: #{tpu_custom_call.1} parent=35 // pred_fallthru
          _
      $region36: #{tpu_custom_call.1} parent=5 // pred_fallthru
        _
      %p1381 = scmp.le.s32.totalorder 2, %s20
      // Predicated region
      $region57: #{tpu_custom_call.1} parent=5 // pred_check
        %p1382 = pneg %p1381
      $region58: #{tpu_custom_call.1} parent=5 // pred_check_branch
        %1384 = sbr.rel (%p1382) target = $region60
      $region59: #{tpu_custom_call.1} parent=5 // pred_region
        %s1385 = ssub.s32 %s20, 2
        // Predicated region
        $region61: #{tpu_custom_call.1} parent=59 // pred_check
          %p1386 = pneg %p165
        $region62: #{tpu_custom_call.1} parent=59 // pred_check_branch
          %1388 = sbr.rel (%p1386) target = $region64
        $region63: #{tpu_custom_call.1} parent=59 // pred_region
          %s1389 = sand.u32 %s150, 1
          %s1390 = scalar_lea.sflag [#allocation5], %s1389
          %s1391 = sand.u32 %s150, 1
          %s1392 = smul.addr %s1391, 64
          %s1393 = scalar_lea.vmem [#allocation11], %s1392
          %1395 = dma.done %s1390, 1024
        $region64: #{tpu_custom_call.1} parent=59 // pred_fallthru
          _
      $region60: #{tpu_custom_call.1} parent=5 // pred_fallthru
        _
    $region6: #{tpu_custom_call.1} parent=1 // loop_footer
      %s24 = sadd.s32 1, %s20
    $region7: #{tpu_custom_call.1} parent=1 // loop_footer_branch
      %19 = sbr.rel target = $region3
    $region8: #{tpu_custom_call.1} parent=1 // loop_exit
      _
    %1396 = vsyncpa [#allocation4], 1
    %s1397 = scalar_lea.sflag [#allocation4], 1
    %1398 = vsyncpa %s1397, 1
    %1399 = vsyncpa [#allocation7], 1
    %s1400 = scalar_lea.sflag [#allocation7], 1
    %1401 = vsyncpa %s1400, 1
    %1402 = vsyncpa [#allocation10], 1
    %1403 = vsyncpa [#allocation5], 1
    %s1404 = scalar_lea.sflag [#allocation5], 1
    %1405 = vsyncpa %s1404, 1

</llo_original>
